<compile_context>
chip_gen: v5e
topology: v5e:2x2
jax: 0.10.0
libtpu: 0.0.40
codegen_flags: <defaults>
</compile_context>

<pallas_src>
import jax
import jax.numpy as jnp
from jax.experimental import pallas as pl
from jax.experimental.pallas import tpu as pltpu


def pagfm_kernel(x_ref, yh_ref, aw_ref, wx_ref, bx_ref, wy_ref, by_ref, o_ref):
    # x_ref  : (TH, W,  C)   high-res tile (NHWC layout, C on lanes)
    # yh_ref : (TH, Wy, C)   y after the height half of the bilinear resize
    # aw_ref : (W, Wy)       width-interpolation matrix (row-stochastic)
    # wx/wy  : (C, M)        folded 1x1-conv + BN weights
    # bx/by  : (1, M)        folded BN biases (f32)
    th, w, c = x_ref.shape
    wy_cols = aw_ref.shape[1]

    x = x_ref[...]                                   # (TH, W, C)
    yh = yh_ref[...]                                 # (TH, Wy, C)

    # Width half of the separable bilinear upsample (height half was applied to
    # the low-res y in the wrapper).  Batched matmul, flash-attention pattern:
    # (TH, W, Wy) x (TH, Wy, C) -> (TH, W, C), f32 accumulation on the MXU.
    # The broadcast keeps C on lanes and avoids any post-matmul transpose.
    aw_b = jnp.broadcast_to(aw_ref[...][None, :, :], (th, w, wy_cols))
    y_up = jnp.einsum('twk,tkc->twc', aw_b, yh,
                      preferred_element_type=jnp.float32)          # (TH, W, C) f32

    # Merge leading dims only (lane dim C unchanged -> no relayout).
    x2 = x.reshape(th * w, c)
    yu2 = y_up.reshape(th * w, c)

    # 1x1 convs with eval-mode BatchNorm folded in.  The y-branch conv is
    # applied AFTER the upsample (exact: interpolation rows sum to 1, so both
    # the linear map and the bias pass through) -> y is interpolated only once.
    x_k = jnp.dot(x2, wx_ref[...], preferred_element_type=jnp.float32) + bx_ref[...]
    y_q = jnp.dot(yu2.astype(wy_ref.dtype), wy_ref[...],
                  preferred_element_type=jnp.float32) + by_ref[...]

    # sim_map = sigmoid( sum_over_channels(x_k * y_q) ) -- VPU mul, XLU reduce,
    # EUP sigmoid, all f32.
    sim = jax.nn.sigmoid(jnp.sum(x_k * y_q, axis=-1, keepdims=True))   # (TH*W, 1)

    out = sim * (yu2 - x2.astype(jnp.float32))
    o_ref[...] = out.reshape(th, w, c).astype(o_ref.dtype)


def bilinear_matrix(out_size, in_size):
    """Row-stochastic matrix implementing PyTorch bilinear, align_corners=False."""
    i = jnp.arange(out_size, dtype=jnp.float32)
    src = (i + 0.5) * (in_size / out_size) - 0.5
    src = jnp.maximum(src, 0.0)            # PyTorch clamps src to 0 for bilinear
    i0 = jnp.floor(src)
    w1 = src - i0
    i0 = i0.astype(jnp.int32)
    i1 = jnp.minimum(i0 + 1, in_size - 1)
    w0 = 1.0 - w1
    rows = jnp.arange(out_size)
    A = jnp.zeros((out_size, in_size), jnp.float32)
    A = A.at[rows, i0].add(w0)
    A = A.at[rows, i1].add(w1)
    return A


def fold_bn(w, gamma, beta, mean, var, eps=1e-5):
    """Fold eval-mode BatchNorm into a (C_in, C_out) 1x1-conv weight."""
    scale = gamma / jnp.sqrt(var + eps)
    return w * scale[None, :], (beta - mean * scale)[None, :]


def _auto_tile_h(H, W, Wy, C, M, itemsize, budget_bytes=10 * 1024 * 1024):
    """Largest divisor of H whose per-grid-step VMEM footprint fits the budget."""
    def step_bytes(th):
        # double-buffered input/output tiles ...
        io = 2 * (th * W * C + th * Wy * C + th * W * C) * itemsize
        # ... plus f32 intermediates (y_up, x_k, y_q) and the broadcast Aw.
        tmp = th * W * C * 4 + 2 * th * W * M * 4 + th * W * Wy * 4
        return io + tmp

    best = 1
    for th in range(1, H + 1):
        if H % th == 0 and step_bytes(th) <= budget_bytes:
            best = th
    return best


def pagfm_forward(x_nchw, y_nchw, params, *, tile_h=None, compute_dtype=None):
    N, C, H, W = x_nchw.shape
    _, _, Hy, Wy = y_nchw.shape
    M = params["wx"].shape[1]
    out_dtype = x_nchw.dtype
    cd = compute_dtype if compute_dtype is not None else x_nchw.dtype
    itemsize = jnp.dtype(cd).itemsize

    if tile_h is None:
        th = _auto_tile_h(H, W, Wy, C, M, itemsize)
    else:
        th = max(1, min(tile_h, H))
        while H % th:
            th -= 1
    grid = (N, H // th)

    # NCHW -> NHWC (channels on lanes).  TODO(synk): keep model NHWC end-to-end.
    x = jnp.transpose(x_nchw, (0, 2, 3, 1))                        # (N, H, W, C)
    y = jnp.transpose(y_nchw, (0, 2, 3, 1))                        # (N, Hy, Wy, C)

    ah = bilinear_matrix(H, Hy)                                    # (H, Hy)
    aw = bilinear_matrix(W, Wy)                                    # (W, Wy)

    # Height half of the separable bilinear resize, on the low-res y (cheap;
    # fused with the layout transpose / dtype cast).  Width half is in-kernel.
    y_h = jnp.einsum('Hh,nhwc->nHwc', ah, y.astype(jnp.float32))   # (N, H, Wy, C)

    x_in = x.astype(cd)
    yh_in = y_h.astype(cd)
    aw_in = aw.astype(cd)
    wx = params["wx"].astype(cd)
    wy = params["wy"].astype(cd)
    bx = params["bx"].astype(jnp.float32)
    by = params["by"].astype(jnp.float32)

    # Advisory cost estimate so XLA can schedule neighbours around the kernel.
    flops = 2 * N * H * W * (Wy * C + 2 * C * M) + 6 * N * H * W * max(C, M)
    bytes_accessed = int(
        x_in.size * x_in.dtype.itemsize
        + yh_in.size * yh_in.dtype.itemsize
        + N * H * W * C * jnp.dtype(out_dtype).itemsize
        + 2 * C * M * jnp.dtype(cd).itemsize
        + W * Wy * jnp.dtype(cd).itemsize)
    cost = pl.CostEstimate(flops=flops, transcendentals=N * H * W,
                           bytes_accessed=bytes_accessed)

    out = pl.pallas_call(
        pagfm_kernel,
        out_shape=jax.ShapeDtypeStruct((N, H, W, C), out_dtype),
        grid=grid,
        in_specs=[
            pl.BlockSpec((None, th, W, C), lambda n, t: (n, t, 0, 0)),   # x tile
            pl.BlockSpec((None, th, Wy, C), lambda n, t: (n, t, 0, 0)),  # y_h tile
            pl.BlockSpec((W, Wy), lambda n, t: (0, 0)),                  # Aw (resident)
            pl.BlockSpec((C, M), lambda n, t: (0, 0)),                   # wx
            pl.BlockSpec((1, M), lambda n, t: (0, 0)),                   # bx
            pl.BlockSpec((C, M), lambda n, t: (0, 0)),                   # wy
            pl.BlockSpec((1, M), lambda n, t: (0, 0)),                   # by
        ],
        out_specs=pl.BlockSpec((None, th, W, C), lambda n, t: (n, t, 0, 0)),
        compiler_params=pltpu.CompilerParams(
            dimension_semantics=("parallel", "parallel"),
            vmem_limit_bytes=32 * 1024 * 1024),
        cost_estimate=cost,
    )(x_in, yh_in, aw_in, wx, bx, wy, by)

    # Back to NCHW to match the PyTorch module's output convention.
    return jnp.transpose(out, (0, 3, 1, 2))


def pagfm_reference(x_nchw, y_nchw, params):
    """Pure-JAX reference mirroring the PyTorch forward (with_channel=False)."""
    N, C, H, W = x_nchw.shape
    _, _, Hy, Wy = y_nchw.shape
    Ah = bilinear_matrix(H, Hy)
    Aw = bilinear_matrix(W, Wy)

    def interp(z):  # (N, c, Hy, Wy) -> (N, c, H, W)
        z = jnp.einsum('Hh,nchw->ncHw', Ah, z)
        return jnp.einsum('Ww,ncHw->ncHW', Aw, z)

    wx, bx, wy, by = params["wx"], params["bx"], params["wy"], params["by"]
    y_q = jnp.einsum('nchw,cm->nmhw', y_nchw, wy) + by[0][None, :, None, None]
    y_q = interp(y_q)
    x_k = jnp.einsum('nchw,cm->nmhw', x_nchw, wx) + bx[0][None, :, None, None]
    sim = jax.nn.sigmoid(jnp.sum(x_k * y_q, axis=1, keepdims=True))
    y_up = interp(y_nchw)
    return sim * (y_up - x_nchw)


if __name__ == "__main__":
    in_channels, mid_channels = 4, 8
    N, H, W = 2, 16, 16
    Hy, Wy = 8, 8  # y is the lower-resolution feature map, as in PIDNet usage

    key = jax.random.PRNGKey(0)
    kx, ky, kwx, kwy = jax.random.split(key, 4)
    x = jax.random.normal(kx, (N, in_channels, H, W), jnp.float32)
    y = jax.random.normal(ky, (N, in_channels, Hy, Wy), jnp.float32)

    # Deterministic parameters. Conv weights are (C_in, M) == conv.weight[:, :, 0, 0].T
    w_fx = jax.random.normal(kwx, (in_channels, mid_channels), jnp.float32) * 0.5
    w_fy = jax.random.normal(kwy, (in_channels, mid_channels), jnp.float32) * 0.5

    # Eval-mode BatchNorm params (deterministic, non-trivial).
    gamma_x = jnp.linspace(0.9, 1.1, mid_channels)
    beta_x = jnp.linspace(-0.1, 0.1, mid_channels)
    mean_x = jnp.linspace(-0.2, 0.2, mid_channels)
    var_x = jnp.linspace(0.5, 1.5, mid_channels)
    gamma_y = jnp.linspace(1.1, 0.9, mid_channels)
    beta_y = jnp.linspace(0.1, -0.1, mid_channels)
    mean_y = jnp.linspace(0.2, -0.2, mid_channels)
    var_y = jnp.linspace(1.5, 0.5, mid_channels)

    wx, bx = fold_bn(w_fx, gamma_x, beta_x, mean_x, var_x)
    wy, by = fold_bn(w_fy, gamma_y, beta_y, mean_y, var_y)
    params = dict(wx=wx, bx=bx, wy=wy, by=by)

    fwd = jax.jit(pagfm_forward, static_argnames=("tile_h", "compute_dtype"))

    ref = pagfm_reference(x, y, params)

    # f32 path, auto tile height, tight check against the PyTorch-order
    # reference (validates the separable interpolation and the conv/upsample
    # commute).
    out = fwd(x, y, params)
    jax.block_until_ready(out)
    assert out.shape == (N, in_channels, H, W)
    assert jnp.allclose(out, ref, atol=1e-4, rtol=1e-4), "f32 mismatch vs reference"

    # Explicit (smaller) tile height exercises a multi-tile grid along H.
    out_t = fwd(x, y, params, tile_h=8)
    jax.block_until_ready(out_t)
    assert jnp.allclose(out_t, ref, atol=1e-4, rtol=1e-4), "tiled f32 mismatch"

    # bf16 operand path (halves HBM/VMEM traffic; accumulation + sigmoid in f32).
    out_bf16 = fwd(x, y, params, compute_dtype=jnp.bfloat16)
    jax.block_until_ready(out_bf16)
    assert jnp.allclose(out_bf16.astype(jnp.float32), ref, atol=1e-1, rtol=1e-1), \
        "bf16 mismatch vs reference"

    print("KERNEL_OK")
</pallas_src>

<mosaic_0001>
module attributes {stable_mosaic.version = 11 : i64} {
  func.func @pagfm_kernel(%arg0: i32, %arg1: i32, %arg2: memref<1x16x16x4xf32, #tpu.memory_space<vmem>>, %arg3: memref<1x16x8x4xf32, #tpu.memory_space<vmem>>, %arg4: memref<16x8xf32, #tpu.memory_space<vmem>>, %arg5: memref<4x8xf32, #tpu.memory_space<vmem>>, %arg6: memref<1x8xf32, #tpu.memory_space<vmem>>, %arg7: memref<4x8xf32, #tpu.memory_space<vmem>>, %arg8: memref<1x8xf32, #tpu.memory_space<vmem>>, %arg9: memref<1x16x16x4xf32, #tpu.memory_space<vmem>>) attributes {dimension_semantics = [#tpu.dimension_semantics<parallel>, #tpu.dimension_semantics<parallel>], iteration_bounds = array<i64: 2, 1>, scalar_prefetch = 0 : i64, scratch_operands = 0 : i64, tpu.core_type = #tpu.core_type<tc>, window_params = [{transform_indices = @transform_0, window_bounds = array<i64: 1, 16, 16, 4>}, {transform_indices = @transform_1, window_bounds = array<i64: 1, 16, 8, 4>}, {pipeline_mode = #tpu.pipeline_mode<synchronous>, transform_indices = @transform_2, window_bounds = array<i64: 16, 8>}, {pipeline_mode = #tpu.pipeline_mode<synchronous>, transform_indices = @transform_3, window_bounds = array<i64: 4, 8>}, {pipeline_mode = #tpu.pipeline_mode<synchronous>, transform_indices = @transform_4, window_bounds = array<i64: 1, 8>}, {pipeline_mode = #tpu.pipeline_mode<synchronous>, transform_indices = @transform_5, window_bounds = array<i64: 4, 8>}, {pipeline_mode = #tpu.pipeline_mode<synchronous>, transform_indices = @transform_6, window_bounds = array<i64: 1, 8>}, {transform_indices = @transform_7, window_bounds = array<i64: 1, 16, 16, 4>}]} {
    %c0 = arith.constant 0 : index
    %c0_0 = arith.constant 0 : index
    %c0_1 = arith.constant 0 : index
    %c0_2 = arith.constant 0 : index
    %0 = vector.load %arg2[%c0, %c0_0, %c0_1, %c0_2] : memref<1x16x16x4xf32, #tpu.memory_space<vmem>>, vector<1x16x16x4xf32>
    %1 = vector.shape_cast %0 : vector<1x16x16x4xf32> to vector<16x16x4xf32>
    %c0_3 = arith.constant 0 : index
    %c0_4 = arith.constant 0 : index
    %c0_5 = arith.constant 0 : index
    %c0_6 = arith.constant 0 : index
    %2 = vector.load %arg3[%c0_3, %c0_4, %c0_5, %c0_6] : memref<1x16x8x4xf32, #tpu.memory_space<vmem>>, vector<1x16x8x4xf32>
    %3 = vector.shape_cast %2 : vector<1x16x8x4xf32> to vector<16x8x4xf32>
    %c0_7 = arith.constant 0 : index
    %c0_8 = arith.constant 0 : index
    %4 = vector.load %arg4[%c0_7, %c0_8] : memref<16x8xf32, #tpu.memory_space<vmem>>, vector<16x8xf32>
    %5 = vector.shape_cast %4 : vector<16x8xf32> to vector<1x16x8xf32>
    %6 = vector.shape_cast %5 : vector<1x16x8xf32> to vector<1x16x8xf32>
    %7 = vector.broadcast %6 : vector<1x16x8xf32> to vector<16x16x8xf32>
    "tpu.trace_start"() <{level = 10 : i32, message = "twk,tkc->twc"}> : () -> ()
    %cst = arith.constant dense<0.000000e+00> : vector<16x16x4xf32>
    %8 = tpu.matmul %7, %3, %cst {dimension_numbers = #tpu.dot_dimension_numbers<[2], [1], [1], [2], [0, 0, 0, 1, 1, 2], [0], [0]>} : vector<16x16x8xf32>, vector<16x8x4xf32>, vector<16x16x4xf32> -> vector<16x16x4xf32>
    "tpu.trace_stop"() : () -> ()
    %9 = vector.shape_cast %1 : vector<16x16x4xf32> to vector<256x4xf32>
    %10 = vector.shape_cast %8 : vector<16x16x4xf32> to vector<256x4xf32>
    %c0_9 = arith.constant 0 : index
    %c0_10 = arith.constant 0 : index
    %11 = vector.load %arg5[%c0_9, %c0_10] : memref<4x8xf32, #tpu.memory_space<vmem>>, vector<4x8xf32>
    %cst_11 = arith.constant dense<0.000000e+00> : vector<256x8xf32>
    %12 = tpu.matmul %9, %11, %cst_11 {dimension_numbers = #tpu.dot_dimension_numbers<[1], [0], [0], [1], [0, 0, 1, 1], [], []>} : vector<256x4xf32>, vector<4x8xf32>, vector<256x8xf32> -> vector<256x8xf32>
    %c0_12 = arith.constant 0 : index
    %c0_13 = arith.constant 0 : index
    %13 = vector.load %arg6[%c0_12, %c0_13] : memref<1x8xf32, #tpu.memory_space<vmem>>, vector<1x8xf32>
    %14 = vector.broadcast %13 : vector<1x8xf32> to vector<256x8xf32>
    %15 = arith.addf %12, %14 : vector<256x8xf32>
    %c0_14 = arith.constant 0 : index
    %c0_15 = arith.constant 0 : index
    %16 = vector.load %arg7[%c0_14, %c0_15] : memref<4x8xf32, #tpu.memory_space<vmem>>, vector<4x8xf32>
    %cst_16 = arith.constant dense<0.000000e+00> : vector<256x8xf32>
    %17 = tpu.matmul %10, %16, %cst_16 {dimension_numbers = #tpu.dot_dimension_numbers<[1], [0], [0], [1], [0, 0, 1, 1], [], []>} : vector<256x4xf32>, vector<4x8xf32>, vector<256x8xf32> -> vector<256x8xf32>
    %c0_17 = arith.constant 0 : index
    %c0_18 = arith.constant 0 : index
    %18 = vector.load %arg8[%c0_17, %c0_18] : memref<1x8xf32, #tpu.memory_space<vmem>>, vector<1x8xf32>
    %19 = vector.broadcast %18 : vector<1x8xf32> to vector<256x8xf32>
    %20 = arith.addf %17, %19 : vector<256x8xf32>
    %21 = arith.mulf %15, %20 : vector<256x8xf32>
    %cst_19 = arith.constant dense<0.000000e+00> : vector<256xf32>
    %22 = vector.multi_reduction <add>, %21, %cst_19 [1] : vector<256x8xf32> to vector<256xf32>
    %23 = vector.shape_cast %22 : vector<256xf32> to vector<256x1xf32>
    %24 = arith.negf %23 : vector<256x1xf32>
    %25 = math.exp %24 : vector<256x1xf32>
    %cst_20 = arith.constant 1.000000e+00 : f32
    %26 = vector.broadcast %cst_20 : f32 to vector<256x1xf32>
    %27 = arith.addf %26, %25 : vector<256x1xf32>
    %28 = arith.divf %26, %27 : vector<256x1xf32>
    %29 = arith.subf %10, %9 : vector<256x4xf32>
    %30 = vector.broadcast %28 : vector<256x1xf32> to vector<256x4xf32>
    %31 = arith.mulf %30, %29 : vector<256x4xf32>
    %32 = vector.shape_cast %31 : vector<256x4xf32> to vector<16x16x4xf32>
    %c0_21 = arith.constant 0 : index
    %c0_22 = arith.constant 0 : index
    %c0_23 = arith.constant 0 : index
    %c0_24 = arith.constant 0 : index
    %33 = vector.load %arg9[%c0_21, %c0_22, %c0_23, %c0_24] : memref<1x16x16x4xf32, #tpu.memory_space<vmem>>, vector<1x16x16x4xf32>
    %34 = vector.shape_cast %33 : vector<1x16x16x4xf32> to vector<16x16x4xf32>
    %35 = vector.shape_cast %32 : vector<16x16x4xf32> to vector<1x16x16x4xf32>
    tpu.vector_store %arg9[%c0_21, %c0_22, %c0_23, %c0_24], %35 {strides = array<i32>} : memref<1x16x16x4xf32, #tpu.memory_space<vmem>>, vector<1x16x16x4xf32>,
    return
  }
  func.func @transform_0(%arg0: i32, %arg1: i32) -> (i32, i32, i32, i32) {
    %c0_i32 = arith.constant 0 : i32
    %c0_i32_0 = arith.constant 0 : i32
    %c0_i32_1 = arith.constant 0 : i32
    return %arg0, %arg1, %c0_i32, %c0_i32_0 : i32, i32, i32, i32
  }
  func.func @transform_1(%arg0: i32, %arg1: i32) -> (i32, i32, i32, i32) {
    %c0_i32 = arith.constant 0 : i32
    %c0_i32_0 = arith.constant 0 : i32
    %c0_i32_1 = arith.constant 0 : i32
    return %arg0, %arg1, %c0_i32, %c0_i32_0 : i32, i32, i32, i32
  }
  func.func @transform_2(%arg0: i32, %arg1: i32) -> (i32, i32) {
    %c0_i32 = arith.constant 0 : i32
    %c0_i32_0 = arith.constant 0 : i32
    %c0_i32_1 = arith.constant 0 : i32
    return %c0_i32, %c0_i32_0 : i32, i32
  }
  func.func @transform_3(%arg0: i32, %arg1: i32) -> (i32, i32) {
    %c0_i32 = arith.constant 0 : i32
    %c0_i32_0 = arith.constant 0 : i32
    %c0_i32_1 = arith.constant 0 : i32
    return %c0_i32, %c0_i32_0 : i32, i32
  }
  func.func @transform_4(%arg0: i32, %arg1: i32) -> (i32, i32) {
    %c0_i32 = arith.constant 0 : i32
    %c0_i32_0 = arith.constant 0 : i32
    %c0_i32_1 = arith.constant 0 : i32
    return %c0_i32, %c0_i32_0 : i32, i32
  }
  func.func @transform_5(%arg0: i32, %arg1: i32) -> (i32, i32) {
    %c0_i32 = arith.constant 0 : i32
    %c0_i32_0 = arith.constant 0 : i32
    %c0_i32_1 = arith.constant 0 : i32
    return %c0_i32, %c0_i32_0 : i32, i32
  }
  func.func @transform_6(%arg0: i32, %arg1: i32) -> (i32, i32) {
    %c0_i32 = arith.constant 0 : i32
    %c0_i32_0 = arith.constant 0 : i32
    %c0_i32_1 = arith.constant 0 : i32
    return %c0_i32, %c0_i32_0 : i32, i32
  }
  func.func @transform_7(%arg0: i32, %arg1: i32) -> (i32, i32, i32, i32) {
    %c0_i32 = arith.constant 0 : i32
    %c0_i32_0 = arith.constant 0 : i32
    %c0_i32_1 = arith.constant 0 : i32
    return %arg0, %arg1, %c0_i32, %c0_i32_0 : i32, i32, i32, i32
  }
}

</mosaic_0001>

<llo_original>
// kernel: pagfm_forward.1
$region0: #{pagfm_forward.1}
  #allocation0 [shape = 'u32[]', space=smem, size = 0x4, offset = 0x4, fixed_abs, tag = 'smem constant byte address 0x4 - core index']
  #allocation1 [shape = 'u32[72,128]{1,0:T(1,128)}', space=vmem, size = 0x9000, scoped, tag = 'internal scratch']
  %s0 = inlined_call_operand.vmem [shape: f32[2,16,16,4], index: 0, kind: input, shape index: {}]
  %s1 = inlined_call_operand.vmem [shape: f32[2,16,8,4], index: 1, kind: input, shape index: {}]
  %s2 = inlined_call_operand.vmem [shape: f32[16,8], index: 2, kind: input, shape index: {}]
  %s3 = inlined_call_operand.vmem [shape: f32[4,8], index: 3, kind: input, shape index: {}]
  %s4 = inlined_call_operand.vmem [shape: f32[1,8], index: 4, kind: input, shape index: {}]
  %s5 = inlined_call_operand.vmem [shape: f32[4,8], index: 5, kind: input, shape index: {}]
  %s6 = inlined_call_operand.vmem [shape: f32[1,8], index: 6, kind: input, shape index: {}]
  %s7 = inlined_call_operand.vmem [shape: f32[2,16,16,4], index: 7, kind: output, shape index: {}]
  %s8 = sld [smem:[#allocation0]]
  $region61: #{pagfm_forward.1} parent=0
    _
  %s10 = ssub.s32 1, %s8
  %s11 = scalar_select 0, %s10, %s8
  loop: start=0, step=1, limit=4
  $region2: #{pagfm_forward.1} parent=0 // loop_pre_header
    _
  $region3: #{pagfm_forward.1} parent=0 // loop_header
    %s13 = sphi 0, %s17
    %p14 = scmp.ge.s32.totalorder %s13, 4
    %s20 = sphi 0, %s32
    %s21 = sphi 0, %s28
    %s22 = sphi 0, %s20
    %s23 = sphi 0, %s21
    %s24 = sphi 0, %s22
    %s25 = sphi 0, %s23
    %s37 = sphi 0, %s39
    %s40 = sphi 0, %s37
    %s41 = sphi 0, %s40
    %s57 = sphi 0, %s41
    %s65 = sphi 0, %s67
    %s68 = sphi 0, %s65
    %s69 = sphi 0, %s68
    %s85 = sphi 0, %s69
    %s89 = sphi 0, %s89
    %s91 = sphi 0, %s89
    %s92 = sphi 0, %s91
    %s106 = sphi 0, %s92
    %s110 = sphi 0, %s110
    %s112 = sphi 0, %s110
    %s113 = sphi 0, %s112
    %s127 = sphi 0, %s113
    %s131 = sphi 0, %s131
    %s133 = sphi 0, %s131
    %s134 = sphi 0, %s133
    %s148 = sphi 0, %s134
    %s152 = sphi 0, %s152
    %s154 = sphi 0, %s152
    %s155 = sphi 0, %s154
    %s169 = sphi 0, %s155
    %s173 = sphi 0, %s173
    %s175 = sphi 0, %s173
    %s176 = sphi 0, %s175
    %s190 = sphi 0, %s176
    %s198 = sphi 0, %s200
    %s201 = sphi 0, %s198
    %s202 = sphi 0, %s201
    %s218 = sphi 0, %s202
  $region4: #{pagfm_forward.1} parent=0 // loop_header_branch
    %16 = sbr.rel (%p14) target = $region8
  $region5: #{pagfm_forward.1} parent=0 // loop_body
    %s18 = ssub.s32 %s13, 1
    %s19 = ssub.s32 %s13, 2
    %s26 = sadd.s32 1, %s21
    %p27 = scmp.ge.s32.totalorder %s26, 1
    %s28 = scalar_select %p27, 0, %s26
    %s29 = sadd.s32 1, %s20
    %s30 = scalar_select %p27, %s29, %s20
    %p31 = scmp.ge.s32.totalorder %s30, 2
    %s32 = scalar_select %p31, 0, %s30
    %s33 = ssub.s32 %s20, %s32
    %s34 = ssub.s32 %s21, %s28
    %s35 = sor.u32 %s33, %s34
    %p36 = scmp.eq.s32.totalorder %s35, 0
    %s38 = sadd.s32 %s37, 1
    %s39 = scalar_select %p36, %s37, %s38
    %p42 = pneg %p36
    %p43 = scmp.eq.s32.totalorder %s13, 1
    %p44 = por %p42, %p43
    %p45 = scmp.ne.s32.totalorder %s37, %s40
    %p46 = scmp.eq.s32.totalorder %s13, 0
    %p47 = por %p45, %p46
    %p48 = scmp.ne.s32.totalorder %s37, %s40
    %p49 = scmp.eq.s32.totalorder %s18, 1
    %p50 = por %p48, %p49
    %p51 = scmp.ne.s32.totalorder %s40, %s41
    %p52 = scmp.eq.s32.totalorder %s18, 0
    %p53 = por %p51, %p52
    %p54 = scmp.ne.s32.totalorder %s40, %s41
    %p55 = scmp.eq.s32.totalorder %s19, 1
    %p56 = por %p54, %p55
    %p58 = scmp.ne.s32.totalorder %s41, %s57
    %p59 = scmp.eq.s32.totalorder %s19, 0
    %p60 = por %p58, %p59
    %s61 = ssub.s32 %s20, %s32
    %s62 = ssub.s32 %s21, %s28
    %s63 = sor.u32 %s61, %s62
    %p64 = scmp.eq.s32.totalorder %s63, 0
    %s66 = sadd.s32 %s65, 1
    %s67 = scalar_select %p64, %s65, %s66
    %p70 = pneg %p64
    %p71 = scmp.eq.s32.totalorder %s13, 1
    %p72 = por %p70, %p71
    %p73 = scmp.ne.s32.totalorder %s65, %s68
    %p74 = scmp.eq.s32.totalorder %s13, 0
    %p75 = por %p73, %p74
    %p76 = scmp.ne.s32.totalorder %s65, %s68
    %p77 = scmp.eq.s32.totalorder %s18, 1
    %p78 = por %p76, %p77
    %p79 = scmp.ne.s32.totalorder %s68, %s69
    %p80 = scmp.eq.s32.totalorder %s18, 0
    %p81 = por %p79, %p80
    %p82 = scmp.ne.s32.totalorder %s68, %s69
    %p83 = scmp.eq.s32.totalorder %s19, 1
    %p84 = por %p82, %p83
    %p86 = scmp.ne.s32.totalorder %s69, %s85
    %p87 = scmp.eq.s32.totalorder %s19, 0
    %p88 = por %p86, %p87
    %s90 = sadd.s32 %s89, 1
    %p93 = scmp.eq.s32.totalorder %s13, 1
    %p94 = scmp.ne.s32.totalorder %s89, %s91
    %p95 = scmp.eq.s32.totalorder %s13, 0
    %p96 = por %p94, %p95
    %p97 = scmp.ne.s32.totalorder %s89, %s91
    %p98 = scmp.eq.s32.totalorder %s18, 1
    %p99 = por %p97, %p98
    %p100 = scmp.ne.s32.totalorder %s91, %s92
    %p101 = scmp.eq.s32.totalorder %s18, 0
    %p102 = por %p100, %p101
    %p103 = scmp.ne.s32.totalorder %s91, %s92
    %p104 = scmp.eq.s32.totalorder %s19, 1
    %p105 = por %p103, %p104
    %p107 = scmp.ne.s32.totalorder %s92, %s106
    %p108 = scmp.eq.s32.totalorder %s19, 0
    %p109 = por %p107, %p108
    %s111 = sadd.s32 %s110, 1
    %p114 = scmp.eq.s32.totalorder %s13, 1
    %p115 = scmp.ne.s32.totalorder %s110, %s112
    %p116 = scmp.eq.s32.totalorder %s13, 0
    %p117 = por %p115, %p116
    %p118 = scmp.ne.s32.totalorder %s110, %s112
    %p119 = scmp.eq.s32.totalorder %s18, 1
    %p120 = por %p118, %p119
    %p121 = scmp.ne.s32.totalorder %s112, %s113
    %p122 = scmp.eq.s32.totalorder %s18, 0
    %p123 = por %p121, %p122
    %p124 = scmp.ne.s32.totalorder %s112, %s113
    %p125 = scmp.eq.s32.totalorder %s19, 1
    %p126 = por %p124, %p125
    %p128 = scmp.ne.s32.totalorder %s113, %s127
    %p129 = scmp.eq.s32.totalorder %s19, 0
    %p130 = por %p128, %p129
    %s132 = sadd.s32 %s131, 1
    %p135 = scmp.eq.s32.totalorder %s13, 1
    %p136 = scmp.ne.s32.totalorder %s131, %s133
    %p137 = scmp.eq.s32.totalorder %s13, 0
    %p138 = por %p136, %p137
    %p139 = scmp.ne.s32.totalorder %s131, %s133
    %p140 = scmp.eq.s32.totalorder %s18, 1
    %p141 = por %p139, %p140
    %p142 = scmp.ne.s32.totalorder %s133, %s134
    %p143 = scmp.eq.s32.totalorder %s18, 0
    %p144 = por %p142, %p143
    %p145 = scmp.ne.s32.totalorder %s133, %s134
    %p146 = scmp.eq.s32.totalorder %s19, 1
    %p147 = por %p145, %p146
    %p149 = scmp.ne.s32.totalorder %s134, %s148
    %p150 = scmp.eq.s32.totalorder %s19, 0
    %p151 = por %p149, %p150
    %s153 = sadd.s32 %s152, 1
    %p156 = scmp.eq.s32.totalorder %s13, 1
    %p157 = scmp.ne.s32.totalorder %s152, %s154
    %p158 = scmp.eq.s32.totalorder %s13, 0
    %p159 = por %p157, %p158
    %p160 = scmp.ne.s32.totalorder %s152, %s154
    %p161 = scmp.eq.s32.totalorder %s18, 1
    %p162 = por %p160, %p161
    %p163 = scmp.ne.s32.totalorder %s154, %s155
    %p164 = scmp.eq.s32.totalorder %s18, 0
    %p165 = por %p163, %p164
    %p166 = scmp.ne.s32.totalorder %s154, %s155
    %p167 = scmp.eq.s32.totalorder %s19, 1
    %p168 = por %p166, %p167
    %p170 = scmp.ne.s32.totalorder %s155, %s169
    %p171 = scmp.eq.s32.totalorder %s19, 0
    %p172 = por %p170, %p171
    %s174 = sadd.s32 %s173, 1
    %p177 = scmp.eq.s32.totalorder %s13, 1
    %p178 = scmp.ne.s32.totalorder %s173, %s175
    %p179 = scmp.eq.s32.totalorder %s13, 0
    %p180 = por %p178, %p179
    %p181 = scmp.ne.s32.totalorder %s173, %s175
    %p182 = scmp.eq.s32.totalorder %s18, 1
    %p183 = por %p181, %p182
    %p184 = scmp.ne.s32.totalorder %s175, %s176
    %p185 = scmp.eq.s32.totalorder %s18, 0
    %p186 = por %p184, %p185
    %p187 = scmp.ne.s32.totalorder %s175, %s176
    %p188 = scmp.eq.s32.totalorder %s19, 1
    %p189 = por %p187, %p188
    %p191 = scmp.ne.s32.totalorder %s176, %s190
    %p192 = scmp.eq.s32.totalorder %s19, 0
    %p193 = por %p191, %p192
    %s194 = ssub.s32 %s20, %s32
    %s195 = ssub.s32 %s21, %s28
    %s196 = sor.u32 %s194, %s195
    %p197 = scmp.eq.s32.totalorder %s196, 0
    %s199 = sadd.s32 %s198, 1
    %s200 = scalar_select %p197, %s198, %s199
    %p203 = pneg %p197
    %p204 = scmp.eq.s32.totalorder %s13, 1
    %p205 = por %p203, %p204
    %p206 = scmp.ne.s32.totalorder %s198, %s201
    %p207 = scmp.eq.s32.totalorder %s13, 0
    %p208 = por %p206, %p207
    %p209 = scmp.ne.s32.totalorder %s198, %s201
    %p210 = scmp.eq.s32.totalorder %s18, 1
    %p211 = por %p209, %p210
    %p212 = scmp.ne.s32.totalorder %s201, %s202
    %p213 = scmp.eq.s32.totalorder %s18, 0
    %p214 = por %p212, %p213
    %p215 = scmp.ne.s32.totalorder %s201, %s202
    %p216 = scmp.eq.s32.totalorder %s19, 1
    %p217 = por %p215, %p216
    %p219 = scmp.ne.s32.totalorder %s202, %s218
    %p220 = scmp.eq.s32.totalorder %s19, 0
    %p221 = por %p219, %p220
    %p222 = scmp.le.s32.totalorder 1, %s13
    %p223 = scmp.lt.s32.totalorder %s13, 3
    %p224 = pnand %p222, %p223
    %p225 = pneg %p224
    // Predicated region
    $region9: #{pagfm_forward.1} parent=5 // pred_check
      _
    $region10: #{pagfm_forward.1} parent=5 // pred_check_branch
      %227 = sbr.rel (%p224) target = $region12
    $region11: #{pagfm_forward.1} parent=5 // pred_region
      %s228 = ssub.s32 %s13, 1
      // Predicated region
      $region13: #{pagfm_forward.1} parent=11 // pred_check
        %p229 = pneg %p102
      $region14: #{pagfm_forward.1} parent=11 // pred_check_branch
        %231 = sbr.rel (%p229) target = $region16
      $region15: #{pagfm_forward.1} parent=11 // pred_region
        _
      $region16: #{pagfm_forward.1} parent=11 // pred_fallthru
        _
      // Predicated region
      $region17: #{pagfm_forward.1} parent=11 // pred_check
        %p232 = pneg %p123
      $region18: #{pagfm_forward.1} parent=11 // pred_check_branch
        %234 = sbr.rel (%p232) target = $region20
      $region19: #{pagfm_forward.1} parent=11 // pred_region
        _
      $region20: #{pagfm_forward.1} parent=11 // pred_fallthru
        _
      // Predicated region
      $region21: #{pagfm_forward.1} parent=11 // pred_check
        %p235 = pneg %p144
      $region22: #{pagfm_forward.1} parent=11 // pred_check_branch
        %237 = sbr.rel (%p235) target = $region24
      $region23: #{pagfm_forward.1} parent=11 // pred_region
        _
      $region24: #{pagfm_forward.1} parent=11 // pred_fallthru
        _
      // Predicated region
      $region25: #{pagfm_forward.1} parent=11 // pred_check
        %p238 = pneg %p165
      $region26: #{pagfm_forward.1} parent=11 // pred_check_branch
        %240 = sbr.rel (%p238) target = $region28
      $region27: #{pagfm_forward.1} parent=11 // pred_region
        _
      $region28: #{pagfm_forward.1} parent=11 // pred_fallthru
        _
      // Predicated region
      $region29: #{pagfm_forward.1} parent=11 // pred_check
        %p241 = pneg %p186
      $region30: #{pagfm_forward.1} parent=11 // pred_check_branch
        %243 = sbr.rel (%p241) target = $region32
      $region31: #{pagfm_forward.1} parent=11 // pred_region
        _
      $region32: #{pagfm_forward.1} parent=11 // pred_fallthru
        _
    $region12: #{pagfm_forward.1} parent=5 // pred_fallthru
      _
    %p244 = scmp.lt.s32.totalorder %s13, 2
    // Predicated region
    $region33: #{pagfm_forward.1} parent=5 // pred_check
      %p245 = pneg %p244
    $region34: #{pagfm_forward.1} parent=5 // pred_check_branch
      %247 = sbr.rel (%p245) target = $region36
    $region35: #{pagfm_forward.1} parent=5 // pred_region
      // Predicated region
      $region37: #{pagfm_forward.1} parent=35 // pred_check
        %p248 = pneg %p47
      $region38: #{pagfm_forward.1} parent=35 // pred_check_branch
        %250 = sbr.rel (%p248) target = $region40
      $region39: #{pagfm_forward.1} parent=35 // pred_region
        %s251 = smul.u32 16, %s21
        %p252 = scmp.lt.s32.totalorder %s20, 1
        %s253 = scalar_select %p252, %s20, 1
        %p254 = scmp.lt.s32.totalorder %s251, 15
        %s255 = scalar_select %p254, %s251, 15
        %s256 = smul.addr %s255, 2
        %s257 = smul.addr %s253, 32
        %s258 = sadd.s32 %s256, %s257
        %s259 = smul.addr %s258, 8
        %s260 = scalar_lea.vmem %s0, %s259
        %s261 = smul.u32 16, %s21
      $region40: #{pagfm_forward.1} parent=35 // pred_fallthru
        _
      // Predicated region
      $region41: #{pagfm_forward.1} parent=35 // pred_check
        %p262 = pneg %p75
      $region42: #{pagfm_forward.1} parent=35 // pred_check_branch
        %264 = sbr.rel (%p262) target = $region44
      $region43: #{pagfm_forward.1} parent=35 // pred_region
        %s265 = smul.u32 16, %s21
        %p266 = scmp.lt.s32.totalorder %s20, 1
        %s267 = scalar_select %p266, %s20, 1
        %p268 = scmp.lt.s32.totalorder %s265, 15
        %s269 = scalar_select %p268, %s265, 15
        %s270 = smul.addr %s267, 16
        %s271 = sadd.s32 %s269, %s270
        %s272 = smul.addr %s271, 8
        %s273 = scalar_lea.vmem %s1, %s272
        %s274 = smul.u32 16, %s21
      $region44: #{pagfm_forward.1} parent=35 // pred_fallthru
        _
    $region36: #{pagfm_forward.1} parent=5 // pred_fallthru
      _
    %p275 = scmp.le.s32.totalorder 1, %s13
    %p276 = scmp.lt.s32.totalorder %s13, 3
    %p277 = pnand %p275, %p276
    %p278 = pneg %p277
    // Predicated region
    $region45: #{pagfm_forward.1} parent=5 // pred_check
      _
    $region46: #{pagfm_forward.1} parent=5 // pred_check_branch
      %280 = sbr.rel (%p277) target = $region48
    $region47: #{pagfm_forward.1} parent=5 // pred_region
      %s281 = ssub.s32 %s13, 1
      %s282 = smul.u32 16, %s23
      %p283 = scmp.lt.s32.totalorder %s22, 1
      %s284 = scalar_select %p283, %s22, 1
      %p285 = scmp.lt.s32.totalorder %s282, 15
      %s286 = scalar_select %p285, %s282, 15
      %s287 = smul.addr %s286, 2
      %s288 = smul.addr %s284, 32
      %s289 = sadd.s32 %s287, %s288
      %s290 = smul.addr %s289, 8
      %s291 = scalar_lea.vmem %s0, %s290
      %p292 = pneg %p53
      %p293 = pneg %p50
      %s294 = smul.u32 16, %s23
      %p295 = scmp.lt.s32.totalorder %s22, 1
      %s296 = scalar_select %p295, %s22, 1
      %p297 = scmp.lt.s32.totalorder %s294, 15
      %s298 = scalar_select %p297, %s294, 15
      %s299 = smul.addr %s296, 16
      %s300 = sadd.s32 %s298, %s299
      %s301 = smul.addr %s300, 8
      %s302 = scalar_lea.vmem %s1, %s301
      %p303 = pneg %p81
      %p304 = pneg %p78
      %p305 = pneg %p102
      %p306 = pneg %p99
      %p307 = pneg %p123
      %p308 = pneg %p120
      %p309 = pneg %p144
      %p310 = pneg %p141
      %p311 = pneg %p165
      %p312 = pneg %p162
      %p313 = pneg %p186
      %p314 = pneg %p183
      %p315 = pneg %p214
      %p316 = pneg %p211
      %s317 = smul.u32 16, %s23
      %p318 = scmp.lt.s32.totalorder %s22, 1
      %s319 = scalar_select %p318, %s22, 1
      %p320 = scmp.lt.s32.totalorder %s317, 15
      %s321 = scalar_select %p320, %s317, 15
      %s322 = smul.addr %s321, 2
      %s323 = smul.addr %s319, 32
      %s324 = sadd.s32 %s322, %s323
      %s325 = smul.addr %s324, 8
      %s326 = scalar_lea.vmem %s7, %s325
      %s327 = smul.u32 16, %s23
      %p328 = scmp.lt.s32.totalorder %s22, 1
      %s329 = scalar_select %p328, %s22, 1
      %p330 = scmp.lt.s32.totalorder %s327, 15
      %s331 = scalar_select %p330, %s327, 15
      %s332 = smul.addr %s331, 2
      %s333 = smul.addr %s329, 32
      %s334 = sadd.s32 %s332, %s333
      %s335 = smul.addr %s334, 8
      %s336 = scalar_lea.vmem %s0, %s335
      %s337 = smul.u32 16, %s23
      %s338 = smul.u32 16, %s23
      %p339 = scmp.lt.s32.totalorder %s22, 1
      %s340 = scalar_select %p339, %s22, 1
      %p341 = scmp.lt.s32.totalorder %s338, 15
      %s342 = scalar_select %p341, %s338, 15
      %s343 = smul.addr %s340, 16
      %s344 = sadd.s32 %s342, %s343
      %s345 = smul.addr %s344, 8
      %s346 = scalar_lea.vmem %s1, %s345
      %s347 = smul.u32 16, %s23
      %s348 = smul.u32 16, %s23
      %p349 = scmp.lt.s32.totalorder %s22, 1
      %s350 = scalar_select %p349, %s22, 1
      %p351 = scmp.lt.s32.totalorder %s348, 15
      %s352 = scalar_select %p351, %s348, 15
      %s353 = smul.addr %s352, 2
      %s354 = smul.addr %s350, 32
      %s355 = sadd.s32 %s353, %s354
      %s356 = smul.addr %s355, 8
      %s357 = scalar_lea.vmem %s7, %s356
      %s358 = smul.u32 16, %s23
      %v359 = vld [vmem:[%s336] sm:$0xff]
      %v360 = vld [vmem:[%s336 + $0x8] sm:$0xff]
      %v361 = vld [vmem:[%s336 + $0x10] sm:$0xff]
      %v362 = vld [vmem:[%s336 + $0x18] sm:$0xff]
      %v363 = vld [vmem:[%s336 + $0x20] sm:$0xff]
      %v364 = vld [vmem:[%s336 + $0x28] sm:$0xff]
      %v365 = vld [vmem:[%s336 + $0x30] sm:$0xff]
      %v366 = vld [vmem:[%s336 + $0x38] sm:$0xff]
      %v367 = vld [vmem:[%s336 + $0x40] sm:$0xff]
      %v368 = vld [vmem:[%s336 + $0x48] sm:$0xff]
      %v369 = vld [vmem:[%s336 + $0x50] sm:$0xff]
      %v370 = vld [vmem:[%s336 + $0x58] sm:$0xff]
      %v371 = vld [vmem:[%s336 + $0x60] sm:$0xff]
      %v372 = vld [vmem:[%s336 + $0x68] sm:$0xff]
      %v373 = vld [vmem:[%s336 + $0x70] sm:$0xff]
      %v374 = vld [vmem:[%s336 + $0x78] sm:$0xff]
      %v375 = vld [vmem:[%s336 + $0x80] sm:$0xff]
      %v376 = vld [vmem:[%s336 + $0x88] sm:$0xff]
      %v377 = vld [vmem:[%s336 + $0x90] sm:$0xff]
      %v378 = vld [vmem:[%s336 + $0x98] sm:$0xff]
      %v379 = vld [vmem:[%s336 + $0xa0] sm:$0xff]
      %v380 = vld [vmem:[%s336 + $0xa8] sm:$0xff]
      %v381 = vld [vmem:[%s336 + $0xb0] sm:$0xff]
      %v382 = vld [vmem:[%s336 + $0xb8] sm:$0xff]
      %v383 = vld [vmem:[%s336 + $0xc0] sm:$0xff]
      %v384 = vld [vmem:[%s336 + $0xc8] sm:$0xff]
      %v385 = vld [vmem:[%s336 + $0xd0] sm:$0xff]
      %v386 = vld [vmem:[%s336 + $0xd8] sm:$0xff]
      %v387 = vld [vmem:[%s336 + $0xe0] sm:$0xff]
      %v388 = vld [vmem:[%s336 + $0xe8] sm:$0xff]
      %v389 = vld [vmem:[%s336 + $0xf0] sm:$0xff]
      %v390 = vld [vmem:[%s336 + $0xf8] sm:$0xff]
      %v391 = vld [vmem:[%s346] sm:$0xff]
      %v392 = vld [vmem:[%s346 + $0x8] sm:$0xff]
      %v393 = vld [vmem:[%s346 + $0x10] sm:$0xff]
      %v394 = vld [vmem:[%s346 + $0x18] sm:$0xff]
      %v395 = vld [vmem:[%s346 + $0x20] sm:$0xff]
      %v396 = vld [vmem:[%s346 + $0x28] sm:$0xff]
      %v397 = vld [vmem:[%s346 + $0x30] sm:$0xff]
      %v398 = vld [vmem:[%s346 + $0x38] sm:$0xff]
      %v399 = vld [vmem:[%s346 + $0x40] sm:$0xff]
      %v400 = vld [vmem:[%s346 + $0x48] sm:$0xff]
      %v401 = vld [vmem:[%s346 + $0x50] sm:$0xff]
      %v402 = vld [vmem:[%s346 + $0x58] sm:$0xff]
      %v403 = vld [vmem:[%s346 + $0x60] sm:$0xff]
      %v404 = vld [vmem:[%s346 + $0x68] sm:$0xff]
      %v405 = vld [vmem:[%s346 + $0x70] sm:$0xff]
      %v406 = vld [vmem:[%s346 + $0x78] sm:$0xff]
      %v407 = vld [vmem:[%s2] sm:$0xff]
      %v408 = vld [vmem:[%s2 + $0x8] sm:$0xff]
      %vm409 = vcmask 64512
      %v411 = vsel %vm409, %v407, 0
      %v414 = vsel %vm409, %v408, 0
      %416 = vmatpush.msra.mxu0 0.0
      %417 = vmatpush.msra.mxu0 0.0
      %418 = vmatpush.msra.mxu0 0.0
      %419 = vmatpush.msra.mxu0 0.0
      %420 = vmatpush.msra.mxu0 0.0
      %421 = vmatpush.msra.mxu0 0.0
      %422 = vmatpush.msra.mxu0 0.0
      %423 = vmatpush.msra.mxu0 0.0
      %424 = vmatpush.msra.mxu0 0.0
      %425 = vmatpush.msra.mxu0 0.0
      %426 = vmatpush.msra.mxu0 0.0
      %427 = vmatpush.msra.mxu0 0.0
      %428 = vmatpush.msra.mxu0 0.0
      %429 = vmatpush.msra.mxu0 0.0
      %430 = vmatpush.msra.mxu0 0.0
      %431 = vmatpush.msra.mxu0 %v391
      %432 = vmatmul.f32.gmra.mxu0 %v411
      %v433 = vpop.f32.mrf.mxu0
      %v434 = vadd.f32 0.0, %v433
      %435 = vmatmul.f32.gmra.mxu0 %v414
      %v436 = vpop.f32.mrf.mxu0
      %v437 = vadd.f32 0.0, %v436
      %438 = vdwg.mxu0
      %439 = vmatpush.msra.mxu0 0.0
      %440 = vmatpush.msra.mxu0 0.0
      %441 = vmatpush.msra.mxu0 0.0
      %442 = vmatpush.msra.mxu0 0.0
      %443 = vmatpush.msra.mxu0 0.0
      %444 = vmatpush.msra.mxu0 0.0
      %445 = vmatpush.msra.mxu0 0.0
      %446 = vmatpush.msra.mxu0 0.0
      %447 = vmatpush.msra.mxu0 0.0
      %448 = vmatpush.msra.mxu0 0.0
      %449 = vmatpush.msra.mxu0 0.0
      %450 = vmatpush.msra.mxu0 0.0
      %451 = vmatpush.msra.mxu0 0.0
      %452 = vmatpush.msra.mxu0 0.0
      %453 = vmatpush.msra.mxu0 0.0
      %454 = vmatpush.msra.mxu0 %v392
      %455 = vmatmul.f32.gmra.mxu0 %v411
      %v456 = vpop.f32.mrf.mxu0
      %v457 = vadd.f32 0.0, %v456
      %458 = vmatmul.f32.gmra.mxu0 %v414
      %v459 = vpop.f32.mrf.mxu0
      %v460 = vadd.f32 0.0, %v459
      %461 = vdwg.mxu0
      %462 = vmatpush.msra.mxu0 0.0
      %463 = vmatpush.msra.mxu0 0.0
      %464 = vmatpush.msra.mxu0 0.0
      %465 = vmatpush.msra.mxu0 0.0
      %466 = vmatpush.msra.mxu0 0.0
      %467 = vmatpush.msra.mxu0 0.0
      %468 = vmatpush.msra.mxu0 0.0
      %469 = vmatpush.msra.mxu0 0.0
      %470 = vmatpush.msra.mxu0 0.0
      %471 = vmatpush.msra.mxu0 0.0
      %472 = vmatpush.msra.mxu0 0.0
      %473 = vmatpush.msra.mxu0 0.0
      %474 = vmatpush.msra.mxu0 0.0
      %475 = vmatpush.msra.mxu0 0.0
      %476 = vmatpush.msra.mxu0 0.0
      %477 = vmatpush.msra.mxu0 %v393
      %478 = vmatmul.f32.gmra.mxu0 %v411
      %v479 = vpop.f32.mrf.mxu0
      %v480 = vadd.f32 0.0, %v479
      %481 = vmatmul.f32.gmra.mxu0 %v414
      %v482 = vpop.f32.mrf.mxu0
      %v483 = vadd.f32 0.0, %v482
      %484 = vdwg.mxu0
      %485 = vmatpush.msra.mxu0 0.0
      %486 = vmatpush.msra.mxu0 0.0
      %487 = vmatpush.msra.mxu0 0.0
      %488 = vmatpush.msra.mxu0 0.0
      %489 = vmatpush.msra.mxu0 0.0
      %490 = vmatpush.msra.mxu0 0.0
      %491 = vmatpush.msra.mxu0 0.0
      %492 = vmatpush.msra.mxu0 0.0
      %493 = vmatpush.msra.mxu0 0.0
      %494 = vmatpush.msra.mxu0 0.0
      %495 = vmatpush.msra.mxu0 0.0
      %496 = vmatpush.msra.mxu0 0.0
      %497 = vmatpush.msra.mxu0 0.0
      %498 = vmatpush.msra.mxu0 0.0
      %499 = vmatpush.msra.mxu0 0.0
      %500 = vmatpush.msra.mxu0 %v394
      %501 = vmatmul.f32.gmra.mxu0 %v411
      %v502 = vpop.f32.mrf.mxu0
      %v503 = vadd.f32 0.0, %v502
      %504 = vmatmul.f32.gmra.mxu0 %v414
      %v505 = vpop.f32.mrf.mxu0
      %v506 = vadd.f32 0.0, %v505
      %507 = vdwg.mxu0
      %508 = vmatpush.msra.mxu0 0.0
      %509 = vmatpush.msra.mxu0 0.0
      %510 = vmatpush.msra.mxu0 0.0
      %511 = vmatpush.msra.mxu0 0.0
      %512 = vmatpush.msra.mxu0 0.0
      %513 = vmatpush.msra.mxu0 0.0
      %514 = vmatpush.msra.mxu0 0.0
      %515 = vmatpush.msra.mxu0 0.0
      %516 = vmatpush.msra.mxu0 0.0
      %517 = vmatpush.msra.mxu0 0.0
      %518 = vmatpush.msra.mxu0 0.0
      %519 = vmatpush.msra.mxu0 0.0
      %520 = vmatpush.msra.mxu0 0.0
      %521 = vmatpush.msra.mxu0 0.0
      %522 = vmatpush.msra.mxu0 0.0
      %523 = vmatpush.msra.mxu0 %v395
      %524 = vmatmul.f32.gmra.mxu0 %v411
      %v525 = vpop.f32.mrf.mxu0
      %v526 = vadd.f32 0.0, %v525
      %527 = vmatmul.f32.gmra.mxu0 %v414
      %v528 = vpop.f32.mrf.mxu0
      %v529 = vadd.f32 0.0, %v528
      %530 = vdwg.mxu0
      %531 = vmatpush.msra.mxu0 0.0
      %532 = vmatpush.msra.mxu0 0.0
      %533 = vmatpush.msra.mxu0 0.0
      %534 = vmatpush.msra.mxu0 0.0
      %535 = vmatpush.msra.mxu0 0.0
      %536 = vmatpush.msra.mxu0 0.0
      %537 = vmatpush.msra.mxu0 0.0
      %538 = vmatpush.msra.mxu0 0.0
      %539 = vmatpush.msra.mxu0 0.0
      %540 = vmatpush.msra.mxu0 0.0
      %541 = vmatpush.msra.mxu0 0.0
      %542 = vmatpush.msra.mxu0 0.0
      %543 = vmatpush.msra.mxu0 0.0
      %544 = vmatpush.msra.mxu0 0.0
      %545 = vmatpush.msra.mxu0 0.0
      %546 = vmatpush.msra.mxu0 %v396
      %547 = vmatmul.f32.gmra.mxu0 %v411
      %v548 = vpop.f32.mrf.mxu0
      %v549 = vadd.f32 0.0, %v548
      %550 = vmatmul.f32.gmra.mxu0 %v414
      %v551 = vpop.f32.mrf.mxu0
      %v552 = vadd.f32 0.0, %v551
      %553 = vdwg.mxu0
      %554 = vmatpush.msra.mxu0 0.0
      %555 = vmatpush.msra.mxu0 0.0
      %556 = vmatpush.msra.mxu0 0.0
      %557 = vmatpush.msra.mxu0 0.0
      %558 = vmatpush.msra.mxu0 0.0
      %559 = vmatpush.msra.mxu0 0.0
      %560 = vmatpush.msra.mxu0 0.0
      %561 = vmatpush.msra.mxu0 0.0
      %562 = vmatpush.msra.mxu0 0.0
      %563 = vmatpush.msra.mxu0 0.0
      %564 = vmatpush.msra.mxu0 0.0
      %565 = vmatpush.msra.mxu0 0.0
      %566 = vmatpush.msra.mxu0 0.0
      %567 = vmatpush.msra.mxu0 0.0
      %568 = vmatpush.msra.mxu0 0.0
      %569 = vmatpush.msra.mxu0 %v397
      %570 = vmatmul.f32.gmra.mxu0 %v411
      %v571 = vpop.f32.mrf.mxu0
      %v572 = vadd.f32 0.0, %v571
      %573 = vmatmul.f32.gmra.mxu0 %v414
      %v574 = vpop.f32.mrf.mxu0
      %v575 = vadd.f32 0.0, %v574
      %576 = vdwg.mxu0
      %577 = vmatpush.msra.mxu0 0.0
      %578 = vmatpush.msra.mxu0 0.0
      %579 = vmatpush.msra.mxu0 0.0
      %580 = vmatpush.msra.mxu0 0.0
      %581 = vmatpush.msra.mxu0 0.0
      %582 = vmatpush.msra.mxu0 0.0
      %583 = vmatpush.msra.mxu0 0.0
      %584 = vmatpush.msra.mxu0 0.0
      %585 = vmatpush.msra.mxu0 0.0
      %586 = vmatpush.msra.mxu0 0.0
      %587 = vmatpush.msra.mxu0 0.0
      %588 = vmatpush.msra.mxu0 0.0
      %589 = vmatpush.msra.mxu0 0.0
      %590 = vmatpush.msra.mxu0 0.0
      %591 = vmatpush.msra.mxu0 0.0
      %592 = vmatpush.msra.mxu0 %v398
      %593 = vmatmul.f32.gmra.mxu0 %v411
      %v594 = vpop.f32.mrf.mxu0
      %v595 = vadd.f32 0.0, %v594
      %596 = vmatmul.f32.gmra.mxu0 %v414
      %v597 = vpop.f32.mrf.mxu0
      %v598 = vadd.f32 0.0, %v597
      %599 = vdwg.mxu0
      %600 = vmatpush.msra.mxu0 0.0
      %601 = vmatpush.msra.mxu0 0.0
      %602 = vmatpush.msra.mxu0 0.0
      %603 = vmatpush.msra.mxu0 0.0
      %604 = vmatpush.msra.mxu0 0.0
      %605 = vmatpush.msra.mxu0 0.0
      %606 = vmatpush.msra.mxu0 0.0
      %607 = vmatpush.msra.mxu0 0.0
      %608 = vmatpush.msra.mxu0 0.0
      %609 = vmatpush.msra.mxu0 0.0
      %610 = vmatpush.msra.mxu0 0.0
      %611 = vmatpush.msra.mxu0 0.0
      %612 = vmatpush.msra.mxu0 0.0
      %613 = vmatpush.msra.mxu0 0.0
      %614 = vmatpush.msra.mxu0 0.0
      %615 = vmatpush.msra.mxu0 %v399
      %616 = vmatmul.f32.gmra.mxu0 %v411
      %v617 = vpop.f32.mrf.mxu0
      %v618 = vadd.f32 0.0, %v617
      %619 = vmatmul.f32.gmra.mxu0 %v414
      %v620 = vpop.f32.mrf.mxu0
      %v621 = vadd.f32 0.0, %v620
      %622 = vdwg.mxu0
      %623 = vmatpush.msra.mxu0 0.0
      %624 = vmatpush.msra.mxu0 0.0
      %625 = vmatpush.msra.mxu0 0.0
      %626 = vmatpush.msra.mxu0 0.0
      %627 = vmatpush.msra.mxu0 0.0
      %628 = vmatpush.msra.mxu0 0.0
      %629 = vmatpush.msra.mxu0 0.0
      %630 = vmatpush.msra.mxu0 0.0
      %631 = vmatpush.msra.mxu0 0.0
      %632 = vmatpush.msra.mxu0 0.0
      %633 = vmatpush.msra.mxu0 0.0
      %634 = vmatpush.msra.mxu0 0.0
      %635 = vmatpush.msra.mxu0 0.0
      %636 = vmatpush.msra.mxu0 0.0
      %637 = vmatpush.msra.mxu0 0.0
      %638 = vmatpush.msra.mxu0 %v400
      %639 = vmatmul.f32.gmra.mxu0 %v411
      %v640 = vpop.f32.mrf.mxu0
      %v641 = vadd.f32 0.0, %v640
      %642 = vmatmul.f32.gmra.mxu0 %v414
      %v643 = vpop.f32.mrf.mxu0
      %v644 = vadd.f32 0.0, %v643
      %645 = vdwg.mxu0
      %646 = vmatpush.msra.mxu0 0.0
      %647 = vmatpush.msra.mxu0 0.0
      %648 = vmatpush.msra.mxu0 0.0
      %649 = vmatpush.msra.mxu0 0.0
      %650 = vmatpush.msra.mxu0 0.0
      %651 = vmatpush.msra.mxu0 0.0
      %652 = vmatpush.msra.mxu0 0.0
      %653 = vmatpush.msra.mxu0 0.0
      %654 = vmatpush.msra.mxu0 0.0
      %655 = vmatpush.msra.mxu0 0.0
      %656 = vmatpush.msra.mxu0 0.0
      %657 = vmatpush.msra.mxu0 0.0
      %658 = vmatpush.msra.mxu0 0.0
      %659 = vmatpush.msra.mxu0 0.0
      %660 = vmatpush.msra.mxu0 0.0
      %661 = vmatpush.msra.mxu0 %v401
      %662 = vmatmul.f32.gmra.mxu0 %v411
      %v663 = vpop.f32.mrf.mxu0
      %v664 = vadd.f32 0.0, %v663
      %665 = vmatmul.f32.gmra.mxu0 %v414
      %v666 = vpop.f32.mrf.mxu0
      %v667 = vadd.f32 0.0, %v666
      %668 = vdwg.mxu0
      %669 = vmatpush.msra.mxu0 0.0
      %670 = vmatpush.msra.mxu0 0.0
      %671 = vmatpush.msra.mxu0 0.0
      %672 = vmatpush.msra.mxu0 0.0
      %673 = vmatpush.msra.mxu0 0.0
      %674 = vmatpush.msra.mxu0 0.0
      %675 = vmatpush.msra.mxu0 0.0
      %676 = vmatpush.msra.mxu0 0.0
      %677 = vmatpush.msra.mxu0 0.0
      %678 = vmatpush.msra.mxu0 0.0
      %679 = vmatpush.msra.mxu0 0.0
      %680 = vmatpush.msra.mxu0 0.0
      %681 = vmatpush.msra.mxu0 0.0
      %682 = vmatpush.msra.mxu0 0.0
      %683 = vmatpush.msra.mxu0 0.0
      %684 = vmatpush.msra.mxu0 %v402
      %685 = vmatmul.f32.gmra.mxu0 %v411
      %v686 = vpop.f32.mrf.mxu0
      %v687 = vadd.f32 0.0, %v686
      %688 = vmatmul.f32.gmra.mxu0 %v414
      %v689 = vpop.f32.mrf.mxu0
      %v690 = vadd.f32 0.0, %v689
      %691 = vdwg.mxu0
      %692 = vmatpush.msra.mxu0 0.0
      %693 = vmatpush.msra.mxu0 0.0
      %694 = vmatpush.msra.mxu0 0.0
      %695 = vmatpush.msra.mxu0 0.0
      %696 = vmatpush.msra.mxu0 0.0
      %697 = vmatpush.msra.mxu0 0.0
      %698 = vmatpush.msra.mxu0 0.0
      %699 = vmatpush.msra.mxu0 0.0
      %700 = vmatpush.msra.mxu0 0.0
      %701 = vmatpush.msra.mxu0 0.0
      %702 = vmatpush.msra.mxu0 0.0
      %703 = vmatpush.msra.mxu0 0.0
      %704 = vmatpush.msra.mxu0 0.0
      %705 = vmatpush.msra.mxu0 0.0
      %706 = vmatpush.msra.mxu0 0.0
      %707 = vmatpush.msra.mxu0 %v403
      %708 = vmatmul.f32.gmra.mxu0 %v411
      %v709 = vpop.f32.mrf.mxu0
      %v710 = vadd.f32 0.0, %v709
      %711 = vmatmul.f32.gmra.mxu0 %v414
      %v712 = vpop.f32.mrf.mxu0
      %v713 = vadd.f32 0.0, %v712
      %714 = vdwg.mxu0
      %715 = vmatpush.msra.mxu0 0.0
      %716 = vmatpush.msra.mxu0 0.0
      %717 = vmatpush.msra.mxu0 0.0
      %718 = vmatpush.msra.mxu0 0.0
      %719 = vmatpush.msra.mxu0 0.0
      %720 = vmatpush.msra.mxu0 0.0
      %721 = vmatpush.msra.mxu0 0.0
      %722 = vmatpush.msra.mxu0 0.0
      %723 = vmatpush.msra.mxu0 0.0
      %724 = vmatpush.msra.mxu0 0.0
      %725 = vmatpush.msra.mxu0 0.0
      %726 = vmatpush.msra.mxu0 0.0
      %727 = vmatpush.msra.mxu0 0.0
      %728 = vmatpush.msra.mxu0 0.0
      %729 = vmatpush.msra.mxu0 0.0
      %730 = vmatpush.msra.mxu0 %v404
      %731 = vmatmul.f32.gmra.mxu0 %v411
      %v732 = vpop.f32.mrf.mxu0
      %v733 = vadd.f32 0.0, %v732
      %734 = vmatmul.f32.gmra.mxu0 %v414
      %v735 = vpop.f32.mrf.mxu0
      %v736 = vadd.f32 0.0, %v735
      %737 = vdwg.mxu0
      %738 = vmatpush.msra.mxu0 0.0
      %739 = vmatpush.msra.mxu0 0.0
      %740 = vmatpush.msra.mxu0 0.0
      %741 = vmatpush.msra.mxu0 0.0
      %742 = vmatpush.msra.mxu0 0.0
      %743 = vmatpush.msra.mxu0 0.0
      %744 = vmatpush.msra.mxu0 0.0
      %745 = vmatpush.msra.mxu0 0.0
      %746 = vmatpush.msra.mxu0 0.0
      %747 = vmatpush.msra.mxu0 0.0
      %748 = vmatpush.msra.mxu0 0.0
      %749 = vmatpush.msra.mxu0 0.0
      %750 = vmatpush.msra.mxu0 0.0
      %751 = vmatpush.msra.mxu0 0.0
      %752 = vmatpush.msra.mxu0 0.0
      %753 = vmatpush.msra.mxu0 %v405
      %754 = vmatmul.f32.gmra.mxu0 %v411
      %v755 = vpop.f32.mrf.mxu0
      %v756 = vadd.f32 0.0, %v755
      %757 = vmatmul.f32.gmra.mxu0 %v414
      %v758 = vpop.f32.mrf.mxu0
      %v759 = vadd.f32 0.0, %v758
      %760 = vdwg.mxu0
      %761 = vmatpush.msra.mxu0 0.0
      %762 = vmatpush.msra.mxu0 0.0
      %763 = vmatpush.msra.mxu0 0.0
      %764 = vmatpush.msra.mxu0 0.0
      %765 = vmatpush.msra.mxu0 0.0
      %766 = vmatpush.msra.mxu0 0.0
      %767 = vmatpush.msra.mxu0 0.0
      %768 = vmatpush.msra.mxu0 0.0
      %769 = vmatpush.msra.mxu0 0.0
      %770 = vmatpush.msra.mxu0 0.0
      %771 = vmatpush.msra.mxu0 0.0
      %772 = vmatpush.msra.mxu0 0.0
      %773 = vmatpush.msra.mxu0 0.0
      %774 = vmatpush.msra.mxu0 0.0
      %775 = vmatpush.msra.mxu0 0.0
      %776 = vmatpush.msra.mxu0 %v406
      %777 = vmatmul.f32.gmra.mxu0 %v411
      %v778 = vpop.f32.mrf.mxu0
      %v779 = vadd.f32 0.0, %v778
      %780 = vmatmul.f32.gmra.mxu0 %v414
      %v781 = vpop.f32.mrf.mxu0
      %v782 = vadd.f32 0.0, %v781
      %783 = vdwg.mxu0
      %v784 = vld [vmem:[%s3] sm:$0xf]
      %v785 = vld [vmem:[%s4] sm:$0x1]
      %v787 = vperm.slane %v785, 0
      %vm789 = vcmask 31744
      %v791 = vsel %vm789, %v359, 0
      %v794 = vsel %vm789, %v360, 0
      %v797 = vsel %vm789, %v361, 0
      %v800 = vsel %vm789, %v362, 0
      %v803 = vsel %vm789, %v363, 0
      %v806 = vsel %vm789, %v364, 0
      %v809 = vsel %vm789, %v365, 0
      %v812 = vsel %vm789, %v366, 0
      %v815 = vsel %vm789, %v367, 0
      %v818 = vsel %vm789, %v368, 0
      %v821 = vsel %vm789, %v369, 0
      %v824 = vsel %vm789, %v370, 0
      %v827 = vsel %vm789, %v371, 0
      %v830 = vsel %vm789, %v372, 0
      %v833 = vsel %vm789, %v373, 0
      %v836 = vsel %vm789, %v374, 0
      %v839 = vsel %vm789, %v375, 0
      %v842 = vsel %vm789, %v376, 0
      %v845 = vsel %vm789, %v377, 0
      %v848 = vsel %vm789, %v378, 0
      %v851 = vsel %vm789, %v379, 0
      %v854 = vsel %vm789, %v380, 0
      %v857 = vsel %vm789, %v381, 0
      %v860 = vsel %vm789, %v382, 0
      %v863 = vsel %vm789, %v383, 0
      %v866 = vsel %vm789, %v384, 0
      %v869 = vsel %vm789, %v385, 0
      %v872 = vsel %vm789, %v386, 0
      %v875 = vsel %vm789, %v387, 0
      %v878 = vsel %vm789, %v388, 0
      %v881 = vsel %vm789, %v389, 0
      %v884 = vsel %vm789, %v390, 0
      %vm886 = vcmask 1043456
      %v888 = vsel %vm886, %v784, 0
      %890 = vmatpush.msra.mxu0 0.0
      %891 = vmatpush.msra.mxu0 0.0
      %892 = vmatpush.msra.mxu0 0.0
      %893 = vmatpush.msra.mxu0 0.0
      %894 = vmatpush.msra.mxu0 0.0
      %895 = vmatpush.msra.mxu0 0.0
      %896 = vmatpush.msra.mxu0 0.0
      %897 = vmatpush.msra.mxu0 0.0
      %898 = vmatpush.msra.mxu0 0.0
      %899 = vmatpush.msra.mxu0 0.0
      %900 = vmatpush.msra.mxu0 0.0
      %901 = vmatpush.msra.mxu0 0.0
      %902 = vmatpush.msra.mxu0 0.0
      %903 = vmatpush.msra.mxu0 0.0
      %904 = vmatpush.msra.mxu0 0.0
      %905 = vmatpush.msra.mxu0 %v888
      %906 = vmatmul.f32.gmra.mxu0 %v791
      %v907 = vpop.f32.mrf.mxu0
      %v908 = vadd.f32 %v787, %v907
      %909 = vmatmul.f32.gmra.mxu0 %v794
      %v910 = vpop.f32.mrf.mxu0
      %v911 = vadd.f32 %v787, %v910
      %912 = vmatmul.f32.gmra.mxu0 %v797
      %v913 = vpop.f32.mrf.mxu0
      %v914 = vadd.f32 %v787, %v913
      %915 = vmatmul.f32.gmra.mxu0 %v800
      %v916 = vpop.f32.mrf.mxu0
      %v917 = vadd.f32 %v787, %v916
      %918 = vmatmul.f32.gmra.mxu0 %v803
      %v919 = vpop.f32.mrf.mxu0
      %v920 = vadd.f32 %v787, %v919
      %921 = vmatmul.f32.gmra.mxu0 %v806
      %v922 = vpop.f32.mrf.mxu0
      %v923 = vadd.f32 %v787, %v922
      %924 = vmatmul.f32.gmra.mxu0 %v809
      %v925 = vpop.f32.mrf.mxu0
      %v926 = vadd.f32 %v787, %v925
      %927 = vmatmul.f32.gmra.mxu0 %v812
      %v928 = vpop.f32.mrf.mxu0
      %v929 = vadd.f32 %v787, %v928
      %930 = vmatmul.f32.gmra.mxu0 %v815
      %v931 = vpop.f32.mrf.mxu0
      %v932 = vadd.f32 %v787, %v931
      %933 = vmatmul.f32.gmra.mxu0 %v818
      %v934 = vpop.f32.mrf.mxu0
      %v935 = vadd.f32 %v787, %v934
      %936 = vmatmul.f32.gmra.mxu0 %v821
      %v937 = vpop.f32.mrf.mxu0
      %v938 = vadd.f32 %v787, %v937
      %939 = vmatmul.f32.gmra.mxu0 %v824
      %v940 = vpop.f32.mrf.mxu0
      %v941 = vadd.f32 %v787, %v940
      %942 = vmatmul.f32.gmra.mxu0 %v827
      %v943 = vpop.f32.mrf.mxu0
      %v944 = vadd.f32 %v787, %v943
      %945 = vmatmul.f32.gmra.mxu0 %v830
      %v946 = vpop.f32.mrf.mxu0
      %v947 = vadd.f32 %v787, %v946
      %948 = vmatmul.f32.gmra.mxu0 %v833
      %v949 = vpop.f32.mrf.mxu0
      %v950 = vadd.f32 %v787, %v949
      %951 = vmatmul.f32.gmra.mxu0 %v836
      %v952 = vpop.f32.mrf.mxu0
      %v953 = vadd.f32 %v787, %v952
      %954 = vmatmul.f32.gmra.mxu0 %v839
      %v955 = vpop.f32.mrf.mxu0
      %v956 = vadd.f32 %v787, %v955
      %957 = vmatmul.f32.gmra.mxu0 %v842
      %v958 = vpop.f32.mrf.mxu0
      %v959 = vadd.f32 %v787, %v958
      %960 = vmatmul.f32.gmra.mxu0 %v845
      %v961 = vpop.f32.mrf.mxu0
      %v962 = vadd.f32 %v787, %v961
      %963 = vmatmul.f32.gmra.mxu0 %v848
      %v964 = vpop.f32.mrf.mxu0
      %v965 = vadd.f32 %v787, %v964
      %966 = vmatmul.f32.gmra.mxu0 %v851
      %v967 = vpop.f32.mrf.mxu0
      %v968 = vadd.f32 %v787, %v967
      %969 = vmatmul.f32.gmra.mxu0 %v854
      %v970 = vpop.f32.mrf.mxu0
      %v971 = vadd.f32 %v787, %v970
      %972 = vmatmul.f32.gmra.mxu0 %v857
      %v973 = vpop.f32.mrf.mxu0
      %v974 = vadd.f32 %v787, %v973
      %975 = vmatmul.f32.gmra.mxu0 %v860
      %v976 = vpop.f32.mrf.mxu0
      %v977 = vadd.f32 %v787, %v976
      %978 = vmatmul.f32.gmra.mxu0 %v863
      %v979 = vpop.f32.mrf.mxu0
      %v980 = vadd.f32 %v787, %v979
      %981 = vmatmul.f32.gmra.mxu0 %v866
      %v982 = vpop.f32.mrf.mxu0
      %v983 = vadd.f32 %v787, %v982
      %984 = vmatmul.f32.gmra.mxu0 %v869
      %v985 = vpop.f32.mrf.mxu0
      %v986 = vadd.f32 %v787, %v985
      %987 = vmatmul.f32.gmra.mxu0 %v872
      %v988 = vpop.f32.mrf.mxu0
      %v989 = vadd.f32 %v787, %v988
      %990 = vmatmul.f32.gmra.mxu0 %v875
      %v991 = vpop.f32.mrf.mxu0
      %v992 = vadd.f32 %v787, %v991
      %993 = vmatmul.f32.gmra.mxu0 %v878
      %v994 = vpop.f32.mrf.mxu0
      %v995 = vadd.f32 %v787, %v994
      %996 = vmatmul.f32.gmra.mxu0 %v881
      %v997 = vpop.f32.mrf.mxu0
      %v998 = vadd.f32 %v787, %v997
      %999 = vmatmul.f32.gmra.mxu0 %v884
      %v1000 = vpop.f32.mrf.mxu0
      %v1001 = vadd.f32 %v787, %v1000
      %1002 = vdwg.mxu0
      %v1003 = vld [vmem:[%s5] sm:$0xf]
      %v1004 = vld [vmem:[%s6] sm:$0x1]
      %v1006 = vperm.slane %v1004, 0
      %v1009 = vsel %vm789, %v434, 0
      %v1012 = vsel %vm789, %v437, 0
      %v1015 = vsel %vm789, %v457, 0
      %v1018 = vsel %vm789, %v460, 0
      %v1021 = vsel %vm789, %v480, 0
      %v1024 = vsel %vm789, %v483, 0
      %v1027 = vsel %vm789, %v503, 0
      %v1030 = vsel %vm789, %v506, 0
      %v1033 = vsel %vm789, %v526, 0
      %v1036 = vsel %vm789, %v529, 0
      %v1039 = vsel %vm789, %v549, 0
      %v1042 = vsel %vm789, %v552, 0
      %v1045 = vsel %vm789, %v572, 0
      %v1048 = vsel %vm789, %v575, 0
      %v1051 = vsel %vm789, %v595, 0
      %v1054 = vsel %vm789, %v598, 0
      %v1057 = vsel %vm789, %v618, 0
      %v1060 = vsel %vm789, %v621, 0
      %v1063 = vsel %vm789, %v641, 0
      %v1066 = vsel %vm789, %v644, 0
      %v1069 = vsel %vm789, %v664, 0
      %v1072 = vsel %vm789, %v667, 0
      %v1075 = vsel %vm789, %v687, 0
      %v1078 = vsel %vm789, %v690, 0
      %v1081 = vsel %vm789, %v710, 0
      %v1084 = vsel %vm789, %v713, 0
      %v1087 = vsel %vm789, %v733, 0
      %v1090 = vsel %vm789, %v736, 0
      %v1093 = vsel %vm789, %v756, 0
      %v1096 = vsel %vm789, %v759, 0
      %v1099 = vsel %vm789, %v779, 0
      %v1102 = vsel %vm789, %v782, 0
      %v1105 = vsel %vm886, %v1003, 0
      %1107 = vmatpush.msra.mxu0 0.0
      %1108 = vmatpush.msra.mxu0 0.0
      %1109 = vmatpush.msra.mxu0 0.0
      %1110 = vmatpush.msra.mxu0 0.0
      %1111 = vmatpush.msra.mxu0 0.0
      %1112 = vmatpush.msra.mxu0 0.0
      %1113 = vmatpush.msra.mxu0 0.0
      %1114 = vmatpush.msra.mxu0 0.0
      %1115 = vmatpush.msra.mxu0 0.0
      %1116 = vmatpush.msra.mxu0 0.0
      %1117 = vmatpush.msra.mxu0 0.0
      %1118 = vmatpush.msra.mxu0 0.0
      %1119 = vmatpush.msra.mxu0 0.0
      %1120 = vmatpush.msra.mxu0 0.0
      %1121 = vmatpush.msra.mxu0 0.0
      %1122 = vmatpush.msra.mxu0 %v1105
      %1123 = vmatmul.f32.gmra.mxu0 %v1009
      %v1124 = vpop.f32.mrf.mxu0
      %v1125 = vadd.f32 %v1006, %v1124
      %1126 = vmatmul.f32.gmra.mxu0 %v1012
      %v1127 = vpop.f32.mrf.mxu0
      %v1128 = vadd.f32 %v1006, %v1127
      %1129 = vmatmul.f32.gmra.mxu0 %v1015
      %v1130 = vpop.f32.mrf.mxu0
      %v1131 = vadd.f32 %v1006, %v1130
      %1132 = vmatmul.f32.gmra.mxu0 %v1018
      %v1133 = vpop.f32.mrf.mxu0
      %v1134 = vadd.f32 %v1006, %v1133
      %1135 = vmatmul.f32.gmra.mxu0 %v1021
      %v1136 = vpop.f32.mrf.mxu0
      %v1137 = vadd.f32 %v1006, %v1136
      %1138 = vmatmul.f32.gmra.mxu0 %v1024
      %v1139 = vpop.f32.mrf.mxu0
      %v1140 = vadd.f32 %v1006, %v1139
      %1141 = vmatmul.f32.gmra.mxu0 %v1027
      %v1142 = vpop.f32.mrf.mxu0
      %v1143 = vadd.f32 %v1006, %v1142
      %1144 = vmatmul.f32.gmra.mxu0 %v1030
      %v1145 = vpop.f32.mrf.mxu0
      %v1146 = vadd.f32 %v1006, %v1145
      %1147 = vmatmul.f32.gmra.mxu0 %v1033
      %v1148 = vpop.f32.mrf.mxu0
      %v1149 = vadd.f32 %v1006, %v1148
      %1150 = vmatmul.f32.gmra.mxu0 %v1036
      %v1151 = vpop.f32.mrf.mxu0
      %v1152 = vadd.f32 %v1006, %v1151
      %1153 = vmatmul.f32.gmra.mxu0 %v1039
      %v1154 = vpop.f32.mrf.mxu0
      %v1155 = vadd.f32 %v1006, %v1154
      %1156 = vmatmul.f32.gmra.mxu0 %v1042
      %v1157 = vpop.f32.mrf.mxu0
      %v1158 = vadd.f32 %v1006, %v1157
      %1159 = vmatmul.f32.gmra.mxu0 %v1045
      %v1160 = vpop.f32.mrf.mxu0
      %v1161 = vadd.f32 %v1006, %v1160
      %1162 = vmatmul.f32.gmra.mxu0 %v1048
      %v1163 = vpop.f32.mrf.mxu0
      %v1164 = vadd.f32 %v1006, %v1163
      %1165 = vmatmul.f32.gmra.mxu0 %v1051
      %v1166 = vpop.f32.mrf.mxu0
      %v1167 = vadd.f32 %v1006, %v1166
      %1168 = vmatmul.f32.gmra.mxu0 %v1054
      %v1169 = vpop.f32.mrf.mxu0
      %v1170 = vadd.f32 %v1006, %v1169
      %1171 = vmatmul.f32.gmra.mxu0 %v1057
      %v1172 = vpop.f32.mrf.mxu0
      %v1173 = vadd.f32 %v1006, %v1172
      %1174 = vmatmul.f32.gmra.mxu0 %v1060
      %v1175 = vpop.f32.mrf.mxu0
      %v1176 = vadd.f32 %v1006, %v1175
      %1177 = vmatmul.f32.gmra.mxu0 %v1063
      %v1178 = vpop.f32.mrf.mxu0
      %v1179 = vadd.f32 %v1006, %v1178
      %1180 = vmatmul.f32.gmra.mxu0 %v1066
      %v1181 = vpop.f32.mrf.mxu0
      %v1182 = vadd.f32 %v1006, %v1181
      %1183 = vmatmul.f32.gmra.mxu0 %v1069
      %v1184 = vpop.f32.mrf.mxu0
      %v1185 = vadd.f32 %v1006, %v1184
      %1186 = vmatmul.f32.gmra.mxu0 %v1072
      %v1187 = vpop.f32.mrf.mxu0
      %v1188 = vadd.f32 %v1006, %v1187
      %1189 = vmatmul.f32.gmra.mxu0 %v1075
      %v1190 = vpop.f32.mrf.mxu0
      %v1191 = vadd.f32 %v1006, %v1190
      %1192 = vmatmul.f32.gmra.mxu0 %v1078
      %v1193 = vpop.f32.mrf.mxu0
      %v1194 = vadd.f32 %v1006, %v1193
      %1195 = vmatmul.f32.gmra.mxu0 %v1081
      %v1196 = vpop.f32.mrf.mxu0
      %v1197 = vadd.f32 %v1006, %v1196
      %1198 = vmatmul.f32.gmra.mxu0 %v1084
      %v1199 = vpop.f32.mrf.mxu0
      %v1200 = vadd.f32 %v1006, %v1199
      %1201 = vmatmul.f32.gmra.mxu0 %v1087
      %v1202 = vpop.f32.mrf.mxu0
      %v1203 = vadd.f32 %v1006, %v1202
      %1204 = vmatmul.f32.gmra.mxu0 %v1090
      %v1205 = vpop.f32.mrf.mxu0
      %v1206 = vadd.f32 %v1006, %v1205
      %1207 = vmatmul.f32.gmra.mxu0 %v1093
      %v1208 = vpop.f32.mrf.mxu0
      %v1209 = vadd.f32 %v1006, %v1208
      %1210 = vmatmul.f32.gmra.mxu0 %v1096
      %v1211 = vpop.f32.mrf.mxu0
      %v1212 = vadd.f32 %v1006, %v1211
      %1213 = vmatmul.f32.gmra.mxu0 %v1099
      %v1214 = vpop.f32.mrf.mxu0
      %v1215 = vadd.f32 %v1006, %v1214
      %1216 = vmatmul.f32.gmra.mxu0 %v1102
      %v1217 = vpop.f32.mrf.mxu0
      %v1218 = vadd.f32 %v1006, %v1217
      %1219 = vdwg.mxu0
      %v1220 = vmul.f32 %v908, %v1125
      %v1221 = vmul.f32 %v911, %v1128
      %v1222 = vmul.f32 %v914, %v1131
      %v1223 = vmul.f32 %v917, %v1134
      %v1224 = vmul.f32 %v920, %v1137
      %v1225 = vmul.f32 %v923, %v1140
      %v1226 = vmul.f32 %v926, %v1143
      %v1227 = vmul.f32 %v929, %v1146
      %v1228 = vmul.f32 %v932, %v1149
      %v1229 = vmul.f32 %v935, %v1152
      %v1230 = vmul.f32 %v938, %v1155
      %v1231 = vmul.f32 %v941, %v1158
      %v1232 = vmul.f32 %v944, %v1161
      %v1233 = vmul.f32 %v947, %v1164
      %v1234 = vmul.f32 %v950, %v1167
      %v1235 = vmul.f32 %v953, %v1170
      %v1236 = vmul.f32 %v956, %v1173
      %v1237 = vmul.f32 %v959, %v1176
      %v1238 = vmul.f32 %v962, %v1179
      %v1239 = vmul.f32 %v965, %v1182
      %v1240 = vmul.f32 %v968, %v1185
      %v1241 = vmul.f32 %v971, %v1188
      %v1242 = vmul.f32 %v974, %v1191
      %v1243 = vmul.f32 %v977, %v1194
      %v1244 = vmul.f32 %v980, %v1197
      %v1245 = vmul.f32 %v983, %v1200
      %v1246 = vmul.f32 %v986, %v1203
      %v1247 = vmul.f32 %v989, %v1206
      %v1248 = vmul.f32 %v992, %v1209
      %v1249 = vmul.f32 %v995, %v1212
      %v1250 = vmul.f32 %v998, %v1215
      %v1251 = vmul.f32 %v1001, %v1218
      %v1252 = vsel %vm409, %v1220, 0.0
      %1253 = vadd.xlane.f32.xlu0 %v1252
      %v1254 = vpop.xlane.xlu0 %1253
      %v1255 = vsel %vm409, %v1221, 0.0
      %1256 = vadd.xlane.f32.xlu0 %v1255
      %v1257 = vpop.xlane.xlu0 %1256
      %v1258 = vsel %vm409, %v1222, 0.0
      %1259 = vadd.xlane.f32.xlu0 %v1258
      %v1260 = vpop.xlane.xlu0 %1259
      %v1261 = vsel %vm409, %v1223, 0.0
      %1262 = vadd.xlane.f32.xlu0 %v1261
      %v1263 = vpop.xlane.xlu0 %1262
      %v1264 = vsel %vm409, %v1224, 0.0
      %1265 = vadd.xlane.f32.xlu0 %v1264
      %v1266 = vpop.xlane.xlu0 %1265
      %v1267 = vsel %vm409, %v1225, 0.0
      %1268 = vadd.xlane.f32.xlu0 %v1267
      %v1269 = vpop.xlane.xlu0 %1268
      %v1270 = vsel %vm409, %v1226, 0.0
      %1271 = vadd.xlane.f32.xlu0 %v1270
      %v1272 = vpop.xlane.xlu0 %1271
      %v1273 = vsel %vm409, %v1227, 0.0
      %1274 = vadd.xlane.f32.xlu0 %v1273
      %v1275 = vpop.xlane.xlu0 %1274
      %v1276 = vsel %vm409, %v1228, 0.0
      %1277 = vadd.xlane.f32.xlu0 %v1276
      %v1278 = vpop.xlane.xlu0 %1277
      %v1279 = vsel %vm409, %v1229, 0.0
      %1280 = vadd.xlane.f32.xlu0 %v1279
      %v1281 = vpop.xlane.xlu0 %1280
      %v1282 = vsel %vm409, %v1230, 0.0
      %1283 = vadd.xlane.f32.xlu0 %v1282
      %v1284 = vpop.xlane.xlu0 %1283
      %v1285 = vsel %vm409, %v1231, 0.0
      %1286 = vadd.xlane.f32.xlu0 %v1285
      %v1287 = vpop.xlane.xlu0 %1286
      %v1288 = vsel %vm409, %v1232, 0.0
      %1289 = vadd.xlane.f32.xlu0 %v1288
      %v1290 = vpop.xlane.xlu0 %1289
      %v1291 = vsel %vm409, %v1233, 0.0
      %1292 = vadd.xlane.f32.xlu0 %v1291
      %v1293 = vpop.xlane.xlu0 %1292
      %v1294 = vsel %vm409, %v1234, 0.0
      %1295 = vadd.xlane.f32.xlu0 %v1294
      %v1296 = vpop.xlane.xlu0 %1295
      %v1297 = vsel %vm409, %v1235, 0.0
      %1298 = vadd.xlane.f32.xlu0 %v1297
      %v1299 = vpop.xlane.xlu0 %1298
      %v1300 = vsel %vm409, %v1236, 0.0
      %1301 = vadd.xlane.f32.xlu0 %v1300
      %v1302 = vpop.xlane.xlu0 %1301
      %v1303 = vsel %vm409, %v1237, 0.0
      %1304 = vadd.xlane.f32.xlu0 %v1303
      %v1305 = vpop.xlane.xlu0 %1304
      %v1306 = vsel %vm409, %v1238, 0.0
      %1307 = vadd.xlane.f32.xlu0 %v1306
      %v1308 = vpop.xlane.xlu0 %1307
      %v1309 = vsel %vm409, %v1239, 0.0
      %1310 = vadd.xlane.f32.xlu0 %v1309
      %v1311 = vpop.xlane.xlu0 %1310
      %v1312 = vsel %vm409, %v1240, 0.0
      %1313 = vadd.xlane.f32.xlu0 %v1312
      %v1314 = vpop.xlane.xlu0 %1313
      %v1315 = vsel %vm409, %v1241, 0.0
      %1316 = vadd.xlane.f32.xlu0 %v1315
      %v1317 = vpop.xlane.xlu0 %1316
      %v1318 = vsel %vm409, %v1242, 0.0
      %1319 = vadd.xlane.f32.xlu0 %v1318
      %v1320 = vpop.xlane.xlu0 %1319
      %v1321 = vsel %vm409, %v1243, 0.0
      %1322 = vadd.xlane.f32.xlu0 %v1321
      %v1323 = vpop.xlane.xlu0 %1322
      %v1324 = vsel %vm409, %v1244, 0.0
      %1325 = vadd.xlane.f32.xlu0 %v1324
      %v1326 = vpop.xlane.xlu0 %1325
      %v1327 = vsel %vm409, %v1245, 0.0
      %1328 = vadd.xlane.f32.xlu0 %v1327
      %v1329 = vpop.xlane.xlu0 %1328
      %v1330 = vsel %vm409, %v1246, 0.0
      %1331 = vadd.xlane.f32.xlu0 %v1330
      %v1332 = vpop.xlane.xlu0 %1331
      %v1333 = vsel %vm409, %v1247, 0.0
      %1334 = vadd.xlane.f32.xlu0 %v1333
      %v1335 = vpop.xlane.xlu0 %1334
      %v1336 = vsel %vm409, %v1248, 0.0
      %1337 = vadd.xlane.f32.xlu0 %v1336
      %v1338 = vpop.xlane.xlu0 %1337
      %v1339 = vsel %vm409, %v1249, 0.0
      %1340 = vadd.xlane.f32.xlu0 %v1339
      %v1341 = vpop.xlane.xlu0 %1340
      %v1342 = vsel %vm409, %v1250, 0.0
      %1343 = vadd.xlane.f32.xlu0 %v1342
      %v1344 = vpop.xlane.xlu0 %1343
      %v1345 = vsel %vm409, %v1251, 0.0
      %1346 = vadd.xlane.f32.xlu0 %v1345
      %v1347 = vpop.xlane.xlu0 %1346
      %v1348 = vxor.u32 %v1254, 2147483648
      %v1349 = vxor.u32 %v1257, 2147483648
      %v1350 = vxor.u32 %v1260, 2147483648
      %v1351 = vxor.u32 %v1263, 2147483648
      %v1352 = vxor.u32 %v1266, 2147483648
      %v1353 = vxor.u32 %v1269, 2147483648
      %v1354 = vxor.u32 %v1272, 2147483648
      %v1355 = vxor.u32 %v1275, 2147483648
      %v1356 = vxor.u32 %v1278, 2147483648
      %v1357 = vxor.u32 %v1281, 2147483648
      %v1358 = vxor.u32 %v1284, 2147483648
      %v1359 = vxor.u32 %v1287, 2147483648
      %v1360 = vxor.u32 %v1290, 2147483648
      %v1361 = vxor.u32 %v1293, 2147483648
      %v1362 = vxor.u32 %v1296, 2147483648
      %v1363 = vxor.u32 %v1299, 2147483648
      %v1364 = vxor.u32 %v1302, 2147483648
      %v1365 = vxor.u32 %v1305, 2147483648
      %v1366 = vxor.u32 %v1308, 2147483648
      %v1367 = vxor.u32 %v1311, 2147483648
      %v1368 = vxor.u32 %v1314, 2147483648
      %v1369 = vxor.u32 %v1317, 2147483648
      %v1370 = vxor.u32 %v1320, 2147483648
      %v1371 = vxor.u32 %v1323, 2147483648
      %v1372 = vxor.u32 %v1326, 2147483648
      %v1373 = vxor.u32 %v1329, 2147483648
      %v1374 = vxor.u32 %v1332, 2147483648
      %v1375 = vxor.u32 %v1335, 2147483648
      %v1376 = vxor.u32 %v1338, 2147483648
      %v1377 = vxor.u32 %v1341, 2147483648
      %v1378 = vxor.u32 %v1344, 2147483648
      %v1379 = vxor.u32 %v1347, 2147483648
      %v1380 = vmul.f32 %v1348, 1.442695
      %v1381 = vpow.pop %v1380
      %v1382 = vmul.f32 %v1349, 1.442695
      %v1383 = vpow.pop %v1382
      %v1384 = vmul.f32 %v1350, 1.442695
      %v1385 = vpow.pop %v1384
      %v1386 = vmul.f32 %v1351, 1.442695
      %v1387 = vpow.pop %v1386
      %v1388 = vmul.f32 %v1352, 1.442695
      %v1389 = vpow.pop %v1388
      %v1390 = vmul.f32 %v1353, 1.442695
      %v1391 = vpow.pop %v1390
      %v1392 = vmul.f32 %v1354, 1.442695
      %v1393 = vpow.pop %v1392
      %v1394 = vmul.f32 %v1355, 1.442695
      %v1395 = vpow.pop %v1394
      %v1396 = vmul.f32 %v1356, 1.442695
      %v1397 = vpow.pop %v1396
      %v1398 = vmul.f32 %v1357, 1.442695
      %v1399 = vpow.pop %v1398
      %v1400 = vmul.f32 %v1358, 1.442695
      %v1401 = vpow.pop %v1400
      %v1402 = vmul.f32 %v1359, 1.442695
      %v1403 = vpow.pop %v1402
      %v1404 = vmul.f32 %v1360, 1.442695
      %v1405 = vpow.pop %v1404
      %v1406 = vmul.f32 %v1361, 1.442695
      %v1407 = vpow.pop %v1406
      %v1408 = vmul.f32 %v1362, 1.442695
      %v1409 = vpow.pop %v1408
      %v1410 = vmul.f32 %v1363, 1.442695
      %v1411 = vpow.pop %v1410
      %v1412 = vmul.f32 %v1364, 1.442695
      %v1413 = vpow.pop %v1412
      %v1414 = vmul.f32 %v1365, 1.442695
      %v1415 = vpow.pop %v1414
      %v1416 = vmul.f32 %v1366, 1.442695
      %v1417 = vpow.pop %v1416
      %v1418 = vmul.f32 %v1367, 1.442695
      %v1419 = vpow.pop %v1418
      %v1420 = vmul.f32 %v1368, 1.442695
      %v1421 = vpow.pop %v1420
      %v1422 = vmul.f32 %v1369, 1.442695
      %v1423 = vpow.pop %v1422
      %v1424 = vmul.f32 %v1370, 1.442695
      %v1425 = vpow.pop %v1424
      %v1426 = vmul.f32 %v1371, 1.442695
      %v1427 = vpow.pop %v1426
      %v1428 = vmul.f32 %v1372, 1.442695
      %v1429 = vpow.pop %v1428
      %v1430 = vmul.f32 %v1373, 1.442695
      %v1431 = vpow.pop %v1430
      %v1432 = vmul.f32 %v1374, 1.442695
      %v1433 = vpow.pop %v1432
      %v1434 = vmul.f32 %v1375, 1.442695
      %v1435 = vpow.pop %v1434
      %v1436 = vmul.f32 %v1376, 1.442695
      %v1437 = vpow.pop %v1436
      %v1438 = vmul.f32 %v1377, 1.442695
      %v1439 = vpow.pop %v1438
      %v1440 = vmul.f32 %v1378, 1.442695
      %v1441 = vpow.pop %v1440
      %v1442 = vmul.f32 %v1379, 1.442695
      %v1443 = vpow.pop %v1442
      %v1444 = vadd.f32 %v1381, 1.0
      %v1445 = vadd.f32 %v1383, 1.0
      %v1446 = vadd.f32 %v1385, 1.0
      %v1447 = vadd.f32 %v1387, 1.0
      %v1448 = vadd.f32 %v1389, 1.0
      %v1449 = vadd.f32 %v1391, 1.0
      %v1450 = vadd.f32 %v1393, 1.0
      %v1451 = vadd.f32 %v1395, 1.0
      %v1452 = vadd.f32 %v1397, 1.0
      %v1453 = vadd.f32 %v1399, 1.0
      %v1454 = vadd.f32 %v1401, 1.0
      %v1455 = vadd.f32 %v1403, 1.0
      %v1456 = vadd.f32 %v1405, 1.0
      %v1457 = vadd.f32 %v1407, 1.0
      %v1458 = vadd.f32 %v1409, 1.0
      %v1459 = vadd.f32 %v1411, 1.0
      %v1460 = vadd.f32 %v1413, 1.0
      %v1461 = vadd.f32 %v1415, 1.0
      %v1462 = vadd.f32 %v1417, 1.0
      %v1463 = vadd.f32 %v1419, 1.0
      %v1464 = vadd.f32 %v1421, 1.0
      %v1465 = vadd.f32 %v1423, 1.0
      %v1466 = vadd.f32 %v1425, 1.0
      %v1467 = vadd.f32 %v1427, 1.0
      %v1468 = vadd.f32 %v1429, 1.0
      %v1469 = vadd.f32 %v1431, 1.0
      %v1470 = vadd.f32 %v1433, 1.0
      %v1471 = vadd.f32 %v1435, 1.0
      %v1472 = vadd.f32 %v1437, 1.0
      %v1473 = vadd.f32 %v1439, 1.0
      %v1474 = vadd.f32 %v1441, 1.0
      %v1475 = vadd.f32 %v1443, 1.0
      %v1476 = vrcp.pop %v1444
      %v1477 = vmul.f32 %v1444, %v1476
      %v1478 = vsub.f32 1.0, %v1477
      %v1479 = vmul.f32 %v1476, %v1478
      %v1480 = vadd.f32 %v1476, %v1479
      %vm1481 = vweird.f32 %v1444
      %vm1482 = vweird.f32 %v1476
      %vm1483 = vmor %vm1481, %vm1482
      %v1484 = vsel %vm1483, %v1476, %v1480
      %v1485 = vand.u32 2147483647, %v1444
      %vm1486 = vcmp.eq.f32.partialorder %v1485, 8.507059e+37
      %v1487 = vand.u32 %v1444, 2147483648
      %v1488 = vor.u32 1.1754944e-38, %v1487
      %v1489 = vsel %vm1486, %v1488, %v1484
      %v1490 = vmul.f32 1.0, %v1489
      %v1491 = vrcp.pop %v1445
      %v1492 = vmul.f32 %v1445, %v1491
      %v1493 = vsub.f32 1.0, %v1492
      %v1494 = vmul.f32 %v1491, %v1493
      %v1495 = vadd.f32 %v1491, %v1494
      %vm1496 = vweird.f32 %v1445
      %vm1497 = vweird.f32 %v1491
      %vm1498 = vmor %vm1496, %vm1497
      %v1499 = vsel %vm1498, %v1491, %v1495
      %v1500 = vand.u32 2147483647, %v1445
      %vm1501 = vcmp.eq.f32.partialorder %v1500, 8.507059e+37
      %v1502 = vand.u32 %v1445, 2147483648
      %v1503 = vor.u32 1.1754944e-38, %v1502
      %v1504 = vsel %vm1501, %v1503, %v1499
      %v1505 = vmul.f32 1.0, %v1504
      %v1506 = vrcp.pop %v1446
      %v1507 = vmul.f32 %v1446, %v1506
      %v1508 = vsub.f32 1.0, %v1507
      %v1509 = vmul.f32 %v1506, %v1508
      %v1510 = vadd.f32 %v1506, %v1509
      %vm1511 = vweird.f32 %v1446
      %vm1512 = vweird.f32 %v1506
      %vm1513 = vmor %vm1511, %vm1512
      %v1514 = vsel %vm1513, %v1506, %v1510
      %v1515 = vand.u32 2147483647, %v1446
      %vm1516 = vcmp.eq.f32.partialorder %v1515, 8.507059e+37
      %v1517 = vand.u32 %v1446, 2147483648
      %v1518 = vor.u32 1.1754944e-38, %v1517
      %v1519 = vsel %vm1516, %v1518, %v1514
      %v1520 = vmul.f32 1.0, %v1519
      %v1521 = vrcp.pop %v1447
      %v1522 = vmul.f32 %v1447, %v1521
      %v1523 = vsub.f32 1.0, %v1522
      %v1524 = vmul.f32 %v1521, %v1523
      %v1525 = vadd.f32 %v1521, %v1524
      %vm1526 = vweird.f32 %v1447
      %vm1527 = vweird.f32 %v1521
      %vm1528 = vmor %vm1526, %vm1527
      %v1529 = vsel %vm1528, %v1521, %v1525
      %v1530 = vand.u32 2147483647, %v1447
      %vm1531 = vcmp.eq.f32.partialorder %v1530, 8.507059e+37
      %v1532 = vand.u32 %v1447, 2147483648
      %v1533 = vor.u32 1.1754944e-38, %v1532
      %v1534 = vsel %vm1531, %v1533, %v1529
      %v1535 = vmul.f32 1.0, %v1534
      %v1536 = vrcp.pop %v1448
      %v1537 = vmul.f32 %v1448, %v1536
      %v1538 = vsub.f32 1.0, %v1537
      %v1539 = vmul.f32 %v1536, %v1538
      %v1540 = vadd.f32 %v1536, %v1539
      %vm1541 = vweird.f32 %v1448
      %vm1542 = vweird.f32 %v1536
      %vm1543 = vmor %vm1541, %vm1542
      %v1544 = vsel %vm1543, %v1536, %v1540
      %v1545 = vand.u32 2147483647, %v1448
      %vm1546 = vcmp.eq.f32.partialorder %v1545, 8.507059e+37
      %v1547 = vand.u32 %v1448, 2147483648
      %v1548 = vor.u32 1.1754944e-38, %v1547
      %v1549 = vsel %vm1546, %v1548, %v1544
      %v1550 = vmul.f32 1.0, %v1549
      %v1551 = vrcp.pop %v1449
      %v1552 = vmul.f32 %v1449, %v1551
      %v1553 = vsub.f32 1.0, %v1552
      %v1554 = vmul.f32 %v1551, %v1553
      %v1555 = vadd.f32 %v1551, %v1554
      %vm1556 = vweird.f32 %v1449
      %vm1557 = vweird.f32 %v1551
      %vm1558 = vmor %vm1556, %vm1557
      %v1559 = vsel %vm1558, %v1551, %v1555
      %v1560 = vand.u32 2147483647, %v1449
      %vm1561 = vcmp.eq.f32.partialorder %v1560, 8.507059e+37
      %v1562 = vand.u32 %v1449, 2147483648
      %v1563 = vor.u32 1.1754944e-38, %v1562
      %v1564 = vsel %vm1561, %v1563, %v1559
      %v1565 = vmul.f32 1.0, %v1564
      %v1566 = vrcp.pop %v1450
      %v1567 = vmul.f32 %v1450, %v1566
      %v1568 = vsub.f32 1.0, %v1567
      %v1569 = vmul.f32 %v1566, %v1568
      %v1570 = vadd.f32 %v1566, %v1569
      %vm1571 = vweird.f32 %v1450
      %vm1572 = vweird.f32 %v1566
      %vm1573 = vmor %vm1571, %vm1572
      %v1574 = vsel %vm1573, %v1566, %v1570
      %v1575 = vand.u32 2147483647, %v1450
      %vm1576 = vcmp.eq.f32.partialorder %v1575, 8.507059e+37
      %v1577 = vand.u32 %v1450, 2147483648
      %v1578 = vor.u32 1.1754944e-38, %v1577
      %v1579 = vsel %vm1576, %v1578, %v1574
      %v1580 = vmul.f32 1.0, %v1579
      %v1581 = vrcp.pop %v1451
      %v1582 = vmul.f32 %v1451, %v1581
      %v1583 = vsub.f32 1.0, %v1582
      %v1584 = vmul.f32 %v1581, %v1583
      %v1585 = vadd.f32 %v1581, %v1584
      %vm1586 = vweird.f32 %v1451
      %vm1587 = vweird.f32 %v1581
      %vm1588 = vmor %vm1586, %vm1587
      %v1589 = vsel %vm1588, %v1581, %v1585
      %v1590 = vand.u32 2147483647, %v1451
      %vm1591 = vcmp.eq.f32.partialorder %v1590, 8.507059e+37
      %v1592 = vand.u32 %v1451, 2147483648
      %v1593 = vor.u32 1.1754944e-38, %v1592
      %v1594 = vsel %vm1591, %v1593, %v1589
      %v1595 = vmul.f32 1.0, %v1594
      %v1596 = vrcp.pop %v1452
      %v1597 = vmul.f32 %v1452, %v1596
      %v1598 = vsub.f32 1.0, %v1597
      %v1599 = vmul.f32 %v1596, %v1598
      %v1600 = vadd.f32 %v1596, %v1599
      %vm1601 = vweird.f32 %v1452
      %vm1602 = vweird.f32 %v1596
      %vm1603 = vmor %vm1601, %vm1602
      %v1604 = vsel %vm1603, %v1596, %v1600
      %v1605 = vand.u32 2147483647, %v1452
      %vm1606 = vcmp.eq.f32.partialorder %v1605, 8.507059e+37
      %v1607 = vand.u32 %v1452, 2147483648
      %v1608 = vor.u32 1.1754944e-38, %v1607
      %v1609 = vsel %vm1606, %v1608, %v1604
      %v1610 = vmul.f32 1.0, %v1609
      %v1611 = vrcp.pop %v1453
      %v1612 = vmul.f32 %v1453, %v1611
      %v1613 = vsub.f32 1.0, %v1612
      %v1614 = vmul.f32 %v1611, %v1613
      %v1615 = vadd.f32 %v1611, %v1614
      %vm1616 = vweird.f32 %v1453
      %vm1617 = vweird.f32 %v1611
      %vm1618 = vmor %vm1616, %vm1617
      %v1619 = vsel %vm1618, %v1611, %v1615
      %v1620 = vand.u32 2147483647, %v1453
      %vm1621 = vcmp.eq.f32.partialorder %v1620, 8.507059e+37
      %v1622 = vand.u32 %v1453, 2147483648
      %v1623 = vor.u32 1.1754944e-38, %v1622
      %v1624 = vsel %vm1621, %v1623, %v1619
      %v1625 = vmul.f32 1.0, %v1624
      %v1626 = vrcp.pop %v1454
      %v1627 = vmul.f32 %v1454, %v1626
      %v1628 = vsub.f32 1.0, %v1627
      %v1629 = vmul.f32 %v1626, %v1628
      %v1630 = vadd.f32 %v1626, %v1629
      %vm1631 = vweird.f32 %v1454
      %vm1632 = vweird.f32 %v1626
      %vm1633 = vmor %vm1631, %vm1632
      %v1634 = vsel %vm1633, %v1626, %v1630
      %v1635 = vand.u32 2147483647, %v1454
      %vm1636 = vcmp.eq.f32.partialorder %v1635, 8.507059e+37
      %v1637 = vand.u32 %v1454, 2147483648
      %v1638 = vor.u32 1.1754944e-38, %v1637
      %v1639 = vsel %vm1636, %v1638, %v1634
      %v1640 = vmul.f32 1.0, %v1639
      %v1641 = vrcp.pop %v1455
      %v1642 = vmul.f32 %v1455, %v1641
      %v1643 = vsub.f32 1.0, %v1642
      %v1644 = vmul.f32 %v1641, %v1643
      %v1645 = vadd.f32 %v1641, %v1644
      %vm1646 = vweird.f32 %v1455
      %vm1647 = vweird.f32 %v1641
      %vm1648 = vmor %vm1646, %vm1647
      %v1649 = vsel %vm1648, %v1641, %v1645
      %v1650 = vand.u32 2147483647, %v1455
      %vm1651 = vcmp.eq.f32.partialorder %v1650, 8.507059e+37
      %v1652 = vand.u32 %v1455, 2147483648
      %v1653 = vor.u32 1.1754944e-38, %v1652
      %v1654 = vsel %vm1651, %v1653, %v1649
      %v1655 = vmul.f32 1.0, %v1654
      %v1656 = vrcp.pop %v1456
      %v1657 = vmul.f32 %v1456, %v1656
      %v1658 = vsub.f32 1.0, %v1657
      %v1659 = vmul.f32 %v1656, %v1658
      %v1660 = vadd.f32 %v1656, %v1659
      %vm1661 = vweird.f32 %v1456
      %vm1662 = vweird.f32 %v1656
      %vm1663 = vmor %vm1661, %vm1662
      %v1664 = vsel %vm1663, %v1656, %v1660
      %v1665 = vand.u32 2147483647, %v1456
      %vm1666 = vcmp.eq.f32.partialorder %v1665, 8.507059e+37
      %v1667 = vand.u32 %v1456, 2147483648
      %v1668 = vor.u32 1.1754944e-38, %v1667
      %v1669 = vsel %vm1666, %v1668, %v1664
      %v1670 = vmul.f32 1.0, %v1669
      %v1671 = vrcp.pop %v1457
      %v1672 = vmul.f32 %v1457, %v1671
      %v1673 = vsub.f32 1.0, %v1672
      %v1674 = vmul.f32 %v1671, %v1673
      %v1675 = vadd.f32 %v1671, %v1674
      %vm1676 = vweird.f32 %v1457
      %vm1677 = vweird.f32 %v1671
      %vm1678 = vmor %vm1676, %vm1677
      %v1679 = vsel %vm1678, %v1671, %v1675
      %v1680 = vand.u32 2147483647, %v1457
      %vm1681 = vcmp.eq.f32.partialorder %v1680, 8.507059e+37
      %v1682 = vand.u32 %v1457, 2147483648
      %v1683 = vor.u32 1.1754944e-38, %v1682
      %v1684 = vsel %vm1681, %v1683, %v1679
      %v1685 = vmul.f32 1.0, %v1684
      %v1686 = vrcp.pop %v1458
      %v1687 = vmul.f32 %v1458, %v1686
      %v1688 = vsub.f32 1.0, %v1687
      %v1689 = vmul.f32 %v1686, %v1688
      %v1690 = vadd.f32 %v1686, %v1689
      %vm1691 = vweird.f32 %v1458
      %vm1692 = vweird.f32 %v1686
      %vm1693 = vmor %vm1691, %vm1692
      %v1694 = vsel %vm1693, %v1686, %v1690
      %v1695 = vand.u32 2147483647, %v1458
      %vm1696 = vcmp.eq.f32.partialorder %v1695, 8.507059e+37
      %v1697 = vand.u32 %v1458, 2147483648
      %v1698 = vor.u32 1.1754944e-38, %v1697
      %v1699 = vsel %vm1696, %v1698, %v1694
      %v1700 = vmul.f32 1.0, %v1699
      %v1701 = vrcp.pop %v1459
      %v1702 = vmul.f32 %v1459, %v1701
      %v1703 = vsub.f32 1.0, %v1702
      %v1704 = vmul.f32 %v1701, %v1703
      %v1705 = vadd.f32 %v1701, %v1704
      %vm1706 = vweird.f32 %v1459
      %vm1707 = vweird.f32 %v1701
      %vm1708 = vmor %vm1706, %vm1707
      %v1709 = vsel %vm1708, %v1701, %v1705
      %v1710 = vand.u32 2147483647, %v1459
      %vm1711 = vcmp.eq.f32.partialorder %v1710, 8.507059e+37
      %v1712 = vand.u32 %v1459, 2147483648
      %v1713 = vor.u32 1.1754944e-38, %v1712
      %v1714 = vsel %vm1711, %v1713, %v1709
      %v1715 = vmul.f32 1.0, %v1714
      %v1716 = vrcp.pop %v1460
      %v1717 = vmul.f32 %v1460, %v1716
      %v1718 = vsub.f32 1.0, %v1717
      %v1719 = vmul.f32 %v1716, %v1718
      %v1720 = vadd.f32 %v1716, %v1719
      %vm1721 = vweird.f32 %v1460
      %vm1722 = vweird.f32 %v1716
      %vm1723 = vmor %vm1721, %vm1722
      %v1724 = vsel %vm1723, %v1716, %v1720
      %v1725 = vand.u32 2147483647, %v1460
      %vm1726 = vcmp.eq.f32.partialorder %v1725, 8.507059e+37
      %v1727 = vand.u32 %v1460, 2147483648
      %v1728 = vor.u32 1.1754944e-38, %v1727
      %v1729 = vsel %vm1726, %v1728, %v1724
      %v1730 = vmul.f32 1.0, %v1729
      %v1731 = vrcp.pop %v1461
      %v1732 = vmul.f32 %v1461, %v1731
      %v1733 = vsub.f32 1.0, %v1732
      %v1734 = vmul.f32 %v1731, %v1733
      %v1735 = vadd.f32 %v1731, %v1734
      %vm1736 = vweird.f32 %v1461
      %vm1737 = vweird.f32 %v1731
      %vm1738 = vmor %vm1736, %vm1737
      %v1739 = vsel %vm1738, %v1731, %v1735
      %v1740 = vand.u32 2147483647, %v1461
      %vm1741 = vcmp.eq.f32.partialorder %v1740, 8.507059e+37
      %v1742 = vand.u32 %v1461, 2147483648
      %v1743 = vor.u32 1.1754944e-38, %v1742
      %v1744 = vsel %vm1741, %v1743, %v1739
      %v1745 = vmul.f32 1.0, %v1744
      %v1746 = vrcp.pop %v1462
      %v1747 = vmul.f32 %v1462, %v1746
      %v1748 = vsub.f32 1.0, %v1747
      %v1749 = vmul.f32 %v1746, %v1748
      %v1750 = vadd.f32 %v1746, %v1749
      %vm1751 = vweird.f32 %v1462
      %vm1752 = vweird.f32 %v1746
      %vm1753 = vmor %vm1751, %vm1752
      %v1754 = vsel %vm1753, %v1746, %v1750
      %v1755 = vand.u32 2147483647, %v1462
      %vm1756 = vcmp.eq.f32.partialorder %v1755, 8.507059e+37
      %v1757 = vand.u32 %v1462, 2147483648
      %v1758 = vor.u32 1.1754944e-38, %v1757
      %v1759 = vsel %vm1756, %v1758, %v1754
      %v1760 = vmul.f32 1.0, %v1759
      %v1761 = vrcp.pop %v1463
      %v1762 = vmul.f32 %v1463, %v1761
      %v1763 = vsub.f32 1.0, %v1762
      %v1764 = vmul.f32 %v1761, %v1763
      %v1765 = vadd.f32 %v1761, %v1764
      %vm1766 = vweird.f32 %v1463
      %vm1767 = vweird.f32 %v1761
      %vm1768 = vmor %vm1766, %vm1767
      %v1769 = vsel %vm1768, %v1761, %v1765
      %v1770 = vand.u32 2147483647, %v1463
      %vm1771 = vcmp.eq.f32.partialorder %v1770, 8.507059e+37
      %v1772 = vand.u32 %v1463, 2147483648
      %v1773 = vor.u32 1.1754944e-38, %v1772
      %v1774 = vsel %vm1771, %v1773, %v1769
      %v1775 = vmul.f32 1.0, %v1774
      %v1776 = vrcp.pop %v1464
      %v1777 = vmul.f32 %v1464, %v1776
      %v1778 = vsub.f32 1.0, %v1777
      %v1779 = vmul.f32 %v1776, %v1778
      %v1780 = vadd.f32 %v1776, %v1779
      %vm1781 = vweird.f32 %v1464
      %vm1782 = vweird.f32 %v1776
      %vm1783 = vmor %vm1781, %vm1782
      %v1784 = vsel %vm1783, %v1776, %v1780
      %v1785 = vand.u32 2147483647, %v1464
      %vm1786 = vcmp.eq.f32.partialorder %v1785, 8.507059e+37
      %v1787 = vand.u32 %v1464, 2147483648
      %v1788 = vor.u32 1.1754944e-38, %v1787
      %v1789 = vsel %vm1786, %v1788, %v1784
      %v1790 = vmul.f32 1.0, %v1789
      %v1791 = vrcp.pop %v1465
      %v1792 = vmul.f32 %v1465, %v1791
      %v1793 = vsub.f32 1.0, %v1792
      %v1794 = vmul.f32 %v1791, %v1793
      %v1795 = vadd.f32 %v1791, %v1794
      %vm1796 = vweird.f32 %v1465
      %vm1797 = vweird.f32 %v1791
      %vm1798 = vmor %vm1796, %vm1797
      %v1799 = vsel %vm1798, %v1791, %v1795
      %v1800 = vand.u32 2147483647, %v1465
      %vm1801 = vcmp.eq.f32.partialorder %v1800, 8.507059e+37
      %v1802 = vand.u32 %v1465, 2147483648
      %v1803 = vor.u32 1.1754944e-38, %v1802
      %v1804 = vsel %vm1801, %v1803, %v1799
      %v1805 = vmul.f32 1.0, %v1804
      %v1806 = vrcp.pop %v1466
      %v1807 = vmul.f32 %v1466, %v1806
      %v1808 = vsub.f32 1.0, %v1807
      %v1809 = vmul.f32 %v1806, %v1808
      %v1810 = vadd.f32 %v1806, %v1809
      %vm1811 = vweird.f32 %v1466
      %vm1812 = vweird.f32 %v1806
      %vm1813 = vmor %vm1811, %vm1812
      %v1814 = vsel %vm1813, %v1806, %v1810
      %v1815 = vand.u32 2147483647, %v1466
      %vm1816 = vcmp.eq.f32.partialorder %v1815, 8.507059e+37
      %v1817 = vand.u32 %v1466, 2147483648
      %v1818 = vor.u32 1.1754944e-38, %v1817
      %v1819 = vsel %vm1816, %v1818, %v1814
      %v1820 = vmul.f32 1.0, %v1819
      %v1821 = vrcp.pop %v1467
      %v1822 = vmul.f32 %v1467, %v1821
      %v1823 = vsub.f32 1.0, %v1822
      %v1824 = vmul.f32 %v1821, %v1823
      %v1825 = vadd.f32 %v1821, %v1824
      %vm1826 = vweird.f32 %v1467
      %vm1827 = vweird.f32 %v1821
      %vm1828 = vmor %vm1826, %vm1827
      %v1829 = vsel %vm1828, %v1821, %v1825
      %v1830 = vand.u32 2147483647, %v1467
      %vm1831 = vcmp.eq.f32.partialorder %v1830, 8.507059e+37
      %v1832 = vand.u32 %v1467, 2147483648
      %v1833 = vor.u32 1.1754944e-38, %v1832
      %v1834 = vsel %vm1831, %v1833, %v1829
      %v1835 = vmul.f32 1.0, %v1834
      %v1836 = vrcp.pop %v1468
      %v1837 = vmul.f32 %v1468, %v1836
      %v1838 = vsub.f32 1.0, %v1837
      %v1839 = vmul.f32 %v1836, %v1838
      %v1840 = vadd.f32 %v1836, %v1839
      %vm1841 = vweird.f32 %v1468
      %vm1842 = vweird.f32 %v1836
      %vm1843 = vmor %vm1841, %vm1842
      %v1844 = vsel %vm1843, %v1836, %v1840
      %v1845 = vand.u32 2147483647, %v1468
      %vm1846 = vcmp.eq.f32.partialorder %v1845, 8.507059e+37
      %v1847 = vand.u32 %v1468, 2147483648
      %v1848 = vor.u32 1.1754944e-38, %v1847
      %v1849 = vsel %vm1846, %v1848, %v1844
      %v1850 = vmul.f32 1.0, %v1849
      %v1851 = vrcp.pop %v1469
      %v1852 = vmul.f32 %v1469, %v1851
      %v1853 = vsub.f32 1.0, %v1852
      %v1854 = vmul.f32 %v1851, %v1853
      %v1855 = vadd.f32 %v1851, %v1854
      %vm1856 = vweird.f32 %v1469
      %vm1857 = vweird.f32 %v1851
      %vm1858 = vmor %vm1856, %vm1857
      %v1859 = vsel %vm1858, %v1851, %v1855
      %v1860 = vand.u32 2147483647, %v1469
      %vm1861 = vcmp.eq.f32.partialorder %v1860, 8.507059e+37
      %v1862 = vand.u32 %v1469, 2147483648
      %v1863 = vor.u32 1.1754944e-38, %v1862
      %v1864 = vsel %vm1861, %v1863, %v1859
      %v1865 = vmul.f32 1.0, %v1864
      %v1866 = vrcp.pop %v1470
      %v1867 = vmul.f32 %v1470, %v1866
      %v1868 = vsub.f32 1.0, %v1867
      %v1869 = vmul.f32 %v1866, %v1868
      %v1870 = vadd.f32 %v1866, %v1869
      %vm1871 = vweird.f32 %v1470
      %vm1872 = vweird.f32 %v1866
      %vm1873 = vmor %vm1871, %vm1872
      %v1874 = vsel %vm1873, %v1866, %v1870
      %v1875 = vand.u32 2147483647, %v1470
      %vm1876 = vcmp.eq.f32.partialorder %v1875, 8.507059e+37
      %v1877 = vand.u32 %v1470, 2147483648
      %v1878 = vor.u32 1.1754944e-38, %v1877
      %v1879 = vsel %vm1876, %v1878, %v1874
      %v1880 = vmul.f32 1.0, %v1879
      %v1881 = vrcp.pop %v1471
      %v1882 = vmul.f32 %v1471, %v1881
      %v1883 = vsub.f32 1.0, %v1882
      %v1884 = vmul.f32 %v1881, %v1883
      %v1885 = vadd.f32 %v1881, %v1884
      %vm1886 = vweird.f32 %v1471
      %vm1887 = vweird.f32 %v1881
      %vm1888 = vmor %vm1886, %vm1887
      %v1889 = vsel %vm1888, %v1881, %v1885
      %v1890 = vand.u32 2147483647, %v1471
      %vm1891 = vcmp.eq.f32.partialorder %v1890, 8.507059e+37
      %v1892 = vand.u32 %v1471, 2147483648
      %v1893 = vor.u32 1.1754944e-38, %v1892
      %v1894 = vsel %vm1891, %v1893, %v1889
      %v1895 = vmul.f32 1.0, %v1894
      %v1896 = vrcp.pop %v1472
      %v1897 = vmul.f32 %v1472, %v1896
      %v1898 = vsub.f32 1.0, %v1897
      %v1899 = vmul.f32 %v1896, %v1898
      %v1900 = vadd.f32 %v1896, %v1899
      %vm1901 = vweird.f32 %v1472
      %vm1902 = vweird.f32 %v1896
      %vm1903 = vmor %vm1901, %vm1902
      %v1904 = vsel %vm1903, %v1896, %v1900
      %v1905 = vand.u32 2147483647, %v1472
      %vm1906 = vcmp.eq.f32.partialorder %v1905, 8.507059e+37
      %v1907 = vand.u32 %v1472, 2147483648
      %v1908 = vor.u32 1.1754944e-38, %v1907
      %v1909 = vsel %vm1906, %v1908, %v1904
      %v1910 = vmul.f32 1.0, %v1909
      %v1911 = vrcp.pop %v1473
      %v1912 = vmul.f32 %v1473, %v1911
      %v1913 = vsub.f32 1.0, %v1912
      %v1914 = vmul.f32 %v1911, %v1913
      %v1915 = vadd.f32 %v1911, %v1914
      %vm1916 = vweird.f32 %v1473
      %vm1917 = vweird.f32 %v1911
      %vm1918 = vmor %vm1916, %vm1917
      %v1919 = vsel %vm1918, %v1911, %v1915
      %v1920 = vand.u32 2147483647, %v1473
      %vm1921 = vcmp.eq.f32.partialorder %v1920, 8.507059e+37
      %v1922 = vand.u32 %v1473, 2147483648
      %v1923 = vor.u32 1.1754944e-38, %v1922
      %v1924 = vsel %vm1921, %v1923, %v1919
      %v1925 = vmul.f32 1.0, %v1924
      %v1926 = vrcp.pop %v1474
      %v1927 = vmul.f32 %v1474, %v1926
      %v1928 = vsub.f32 1.0, %v1927
      %v1929 = vmul.f32 %v1926, %v1928
      %v1930 = vadd.f32 %v1926, %v1929
      %vm1931 = vweird.f32 %v1474
      %vm1932 = vweird.f32 %v1926
      %vm1933 = vmor %vm1931, %vm1932
      %v1934 = vsel %vm1933, %v1926, %v1930
      %v1935 = vand.u32 2147483647, %v1474
      %vm1936 = vcmp.eq.f32.partialorder %v1935, 8.507059e+37
      %v1937 = vand.u32 %v1474, 2147483648
      %v1938 = vor.u32 1.1754944e-38, %v1937
      %v1939 = vsel %vm1936, %v1938, %v1934
      %v1940 = vmul.f32 1.0, %v1939
      %v1941 = vrcp.pop %v1475
      %v1942 = vmul.f32 %v1475, %v1941
      %v1943 = vsub.f32 1.0, %v1942
      %v1944 = vmul.f32 %v1941, %v1943
      %v1945 = vadd.f32 %v1941, %v1944
      %vm1946 = vweird.f32 %v1475
      %vm1947 = vweird.f32 %v1941
      %vm1948 = vmor %vm1946, %vm1947
      %v1949 = vsel %vm1948, %v1941, %v1945
      %v1950 = vand.u32 2147483647, %v1475
      %vm1951 = vcmp.eq.f32.partialorder %v1950, 8.507059e+37
      %v1952 = vand.u32 %v1475, 2147483648
      %v1953 = vor.u32 1.1754944e-38, %v1952
      %v1954 = vsel %vm1951, %v1953, %v1949
      %v1955 = vmul.f32 1.0, %v1954
      %v1956 = vsub.f32 %v434, %v359
      %v1957 = vsub.f32 %v437, %v360
      %v1958 = vsub.f32 %v457, %v361
      %v1959 = vsub.f32 %v460, %v362
      %v1960 = vsub.f32 %v480, %v363
      %v1961 = vsub.f32 %v483, %v364
      %v1962 = vsub.f32 %v503, %v365
      %v1963 = vsub.f32 %v506, %v366
      %v1964 = vsub.f32 %v526, %v367
      %v1965 = vsub.f32 %v529, %v368
      %v1966 = vsub.f32 %v549, %v369
      %v1967 = vsub.f32 %v552, %v370
      %v1968 = vsub.f32 %v572, %v371
      %v1969 = vsub.f32 %v575, %v372
      %v1970 = vsub.f32 %v595, %v373
      %v1971 = vsub.f32 %v598, %v374
      %v1972 = vsub.f32 %v618, %v375
      %v1973 = vsub.f32 %v621, %v376
      %v1974 = vsub.f32 %v641, %v377
      %v1975 = vsub.f32 %v644, %v378
      %v1976 = vsub.f32 %v664, %v379
      %v1977 = vsub.f32 %v667, %v380
      %v1978 = vsub.f32 %v687, %v381
      %v1979 = vsub.f32 %v690, %v382
      %v1980 = vsub.f32 %v710, %v383
      %v1981 = vsub.f32 %v713, %v384
      %v1982 = vsub.f32 %v733, %v385
      %v1983 = vsub.f32 %v736, %v386
      %v1984 = vsub.f32 %v756, %v387
      %v1985 = vsub.f32 %v759, %v388
      %v1986 = vsub.f32 %v779, %v389
      %v1987 = vsub.f32 %v782, %v390
      %v1988 = vmul.f32 %v1490, %v1956
      %v1989 = vmul.f32 %v1505, %v1957
      %v1990 = vmul.f32 %v1520, %v1958
      %v1991 = vmul.f32 %v1535, %v1959
      %v1992 = vmul.f32 %v1550, %v1960
      %v1993 = vmul.f32 %v1565, %v1961
      %v1994 = vmul.f32 %v1580, %v1962
      %v1995 = vmul.f32 %v1595, %v1963
      %v1996 = vmul.f32 %v1610, %v1964
      %v1997 = vmul.f32 %v1625, %v1965
      %v1998 = vmul.f32 %v1640, %v1966
      %v1999 = vmul.f32 %v1655, %v1967
      %v2000 = vmul.f32 %v1670, %v1968
      %v2001 = vmul.f32 %v1685, %v1969
      %v2002 = vmul.f32 %v1700, %v1970
      %v2003 = vmul.f32 %v1715, %v1971
      %v2004 = vmul.f32 %v1730, %v1972
      %v2005 = vmul.f32 %v1745, %v1973
      %v2006 = vmul.f32 %v1760, %v1974
      %v2007 = vmul.f32 %v1775, %v1975
      %v2008 = vmul.f32 %v1790, %v1976
      %v2009 = vmul.f32 %v1805, %v1977
      %v2010 = vmul.f32 %v1820, %v1978
      %v2011 = vmul.f32 %v1835, %v1979
      %v2012 = vmul.f32 %v1850, %v1980
      %v2013 = vmul.f32 %v1865, %v1981
      %v2014 = vmul.f32 %v1880, %v1982
      %v2015 = vmul.f32 %v1895, %v1983
      %v2016 = vmul.f32 %v1910, %v1984
      %v2017 = vmul.f32 %v1925, %v1985
      %v2018 = vmul.f32 %v1940, %v1986
      %v2019 = vmul.f32 %v1955, %v1987
      %2020 = vst.msk [vmem:[%s357] sm:$0xff] %vm789, %v1988
      %2021 = vst.msk [vmem:[%s357 + $0x8] sm:$0xff] %vm789, %v1989
      %2022 = vst.msk [vmem:[%s357 + $0x10] sm:$0xff] %vm789, %v1990
      %2023 = vst.msk [vmem:[%s357 + $0x18] sm:$0xff] %vm789, %v1991
      %2024 = vst.msk [vmem:[%s357 + $0x20] sm:$0xff] %vm789, %v1992
      %2025 = vst.msk [vmem:[%s357 + $0x28] sm:$0xff] %vm789, %v1993
      %2026 = vst.msk [vmem:[%s357 + $0x30] sm:$0xff] %vm789, %v1994
      %2027 = vst.msk [vmem:[%s357 + $0x38] sm:$0xff] %vm789, %v1995
      %2028 = vst.msk [vmem:[%s357 + $0x40] sm:$0xff] %vm789, %v1996
      %2029 = vst.msk [vmem:[%s357 + $0x48] sm:$0xff] %vm789, %v1997
      %2030 = vst.msk [vmem:[%s357 + $0x50] sm:$0xff] %vm789, %v1998
      %2031 = vst.msk [vmem:[%s357 + $0x58] sm:$0xff] %vm789, %v1999
      %2032 = vst.msk [vmem:[%s357 + $0x60] sm:$0xff] %vm789, %v2000
      %2033 = vst.msk [vmem:[%s357 + $0x68] sm:$0xff] %vm789, %v2001
      %2034 = vst.msk [vmem:[%s357 + $0x70] sm:$0xff] %vm789, %v2002
      %2035 = vst.msk [vmem:[%s357 + $0x78] sm:$0xff] %vm789, %v2003
      %2036 = vst.msk [vmem:[%s357 + $0x80] sm:$0xff] %vm789, %v2004
      %2037 = vst.msk [vmem:[%s357 + $0x88] sm:$0xff] %vm789, %v2005
      %2038 = vst.msk [vmem:[%s357 + $0x90] sm:$0xff] %vm789, %v2006
      %2039 = vst.msk [vmem:[%s357 + $0x98] sm:$0xff] %vm789, %v2007
      %2040 = vst.msk [vmem:[%s357 + $0xa0] sm:$0xff] %vm789, %v2008
      %2041 = vst.msk [vmem:[%s357 + $0xa8] sm:$0xff] %vm789, %v2009
      %2042 = vst.msk [vmem:[%s357 + $0xb0] sm:$0xff] %vm789, %v2010
      %2043 = vst.msk [vmem:[%s357 + $0xb8] sm:$0xff] %vm789, %v2011
      %2044 = vst.msk [vmem:[%s357 + $0xc0] sm:$0xff] %vm789, %v2012
      %2045 = vst.msk [vmem:[%s357 + $0xc8] sm:$0xff] %vm789, %v2013
      %2046 = vst.msk [vmem:[%s357 + $0xd0] sm:$0xff] %vm789, %v2014
      %2047 = vst.msk [vmem:[%s357 + $0xd8] sm:$0xff] %vm789, %v2015
      %2048 = vst.msk [vmem:[%s357 + $0xe0] sm:$0xff] %vm789, %v2016
      %2049 = vst.msk [vmem:[%s357 + $0xe8] sm:$0xff] %vm789, %v2017
      %2050 = vst.msk [vmem:[%s357 + $0xf0] sm:$0xff] %vm789, %v2018
      %2051 = vst.msk [vmem:[%s357 + $0xf8] sm:$0xff] %vm789, %v2019
      %s2052 = smul.u32 16, %s23
      %p2053 = scmp.lt.s32.totalorder %s22, 1
      %s2054 = scalar_select %p2053, %s22, 1
      %p2055 = scmp.lt.s32.totalorder %s2052, 15
      %s2056 = scalar_select %p2055, %s2052, 15
      %s2057 = smul.addr %s2056, 2
      %s2058 = smul.addr %s2054, 32
      %s2059 = sadd.s32 %s2057, %s2058
      %s2060 = smul.addr %s2059, 8
      %s2061 = scalar_lea.vmem %s7, %s2060
      // Predicated region
      $region49: #{pagfm_forward.1} parent=47 // pred_check
        %p2062 = pneg %p211
      $region50: #{pagfm_forward.1} parent=47 // pred_check_branch
        %2064 = sbr.rel (%p2062) target = $region52
      $region51: #{pagfm_forward.1} parent=47 // pred_region
        %s2065 = smul.u32 16, %s23
      $region52: #{pagfm_forward.1} parent=47 // pred_fallthru
        _
    $region48: #{pagfm_forward.1} parent=5 // pred_fallthru
      _
    %p2066 = scmp.le.s32.totalorder 2, %s13
    // Predicated region
    $region53: #{pagfm_forward.1} parent=5 // pred_check
      %p2067 = pneg %p2066
    $region54: #{pagfm_forward.1} parent=5 // pred_check_branch
      %2069 = sbr.rel (%p2067) target = $region56
    $region55: #{pagfm_forward.1} parent=5 // pred_region
      %s2070 = ssub.s32 %s13, 2
      // Predicated region
      $region57: #{pagfm_forward.1} parent=55 // pred_check
        %p2071 = pneg %p217
      $region58: #{pagfm_forward.1} parent=55 // pred_check_branch
        %2073 = sbr.rel (%p2071) target = $region60
      $region59: #{pagfm_forward.1} parent=55 // pred_region
        %s2074 = smul.u32 16, %s25
        %p2075 = scmp.lt.s32.totalorder %s24, 1
        %s2076 = scalar_select %p2075, %s24, 1
        %p2077 = scmp.lt.s32.totalorder %s2074, 15
        %s2078 = scalar_select %p2077, %s2074, 15
        %s2079 = smul.addr %s2078, 2
        %s2080 = smul.addr %s2076, 32
        %s2081 = sadd.s32 %s2079, %s2080
        %s2082 = smul.addr %s2081, 8
        %s2083 = scalar_lea.vmem %s7, %s2082
      $region60: #{pagfm_forward.1} parent=55 // pred_fallthru
        _
    $region56: #{pagfm_forward.1} parent=5 // pred_fallthru
      _
  $region6: #{pagfm_forward.1} parent=0 // loop_footer
    %s17 = sadd.s32 1, %s13
  $region7: #{pagfm_forward.1} parent=0 // loop_footer_branch
    %12 = sbr.rel target = $region3
  $region8: #{pagfm_forward.1} parent=0 // loop_exit
    _

</llo_original>
